<compile_context>
chip_gen: v7x
topology: tpu7x:2x2x1
jax: 0.10.0
libtpu: 0.0.40
codegen_flags: <defaults>
</compile_context>

<pallas_src>
import functools
import math

import jax
import jax.numpy as jnp
from jax import lax
from jax.experimental import pallas as pl
from jax.experimental.pallas import tpu as pltpu


def _round_up(x, m):
    return (x + m - 1) // m * m


# ----------------------------------------------------------------------------
# Fused kernel. grid = (B, S_tiles, KV_tiles), semantics ("parallel","parallel","arbitrary")
# ----------------------------------------------------------------------------
def fused_mhca_kernel(tok_ref, cond_ref, wqres_ref, wkv_ref, wo_ref,
                      bq_ref, bv_ref, bo_ref, out_ref,
                      q_sc, m_sc, l_sc, acc_sc,
                      *, num_heads, head_dim, e_pad, kv_tile, kv_len):
    li = pl.program_id(2)
    n_l = pl.num_programs(2)
    d = head_dim

    # ---- first KV tile: Q projection + residual path + online-softmax state init
    @pl.when(li == 0)
    def _():
        x = tok_ref[0].astype(jnp.bfloat16)                              # (ts, Ep)
        # one wide matmul: x @ [Wq*scale | Wres] -> (ts, 2*Ep)
        qr = jnp.dot(x, wqres_ref[...], preferred_element_type=jnp.float32)
        q_sc[...] = (qr[:, :e_pad] + bq_ref[...]).astype(jnp.bfloat16)   # fused q_proj∘in_proj_q, scale folded
        out_ref[0] = qr[:, e_pad:] + bo_ref[...]                         # tokens @ out_w.T + fused bias
        m_sc[...] = jnp.full_like(m_sc, -jnp.inf)
        l_sc[...] = jnp.zeros_like(l_sc)
        acc_sc[...] = jnp.zeros_like(acc_sc)

    # ---- K/V projection for this conditioning tile: one wide matmul cond @ [Wk | Wv]
    c = cond_ref[0].astype(jnp.bfloat16)                                 # (tl, Cp)
    kv = jnp.dot(c, wkv_ref[...], preferred_element_type=jnp.float32)    # (tl, 2*Ep)
    k_b = kv[:, :e_pad].astype(jnp.bfloat16)                             # K bias dropped: cancels in softmax
    v_b = (kv[:, e_pad:] + bv_ref[...]).astype(jnp.bfloat16)

    q_all = q_sc[...]                                                    # (ts, Ep) bf16

    # mask padded key rows (only when L was padded up to a tile multiple)
    need_mask = (kv_len % kv_tile) != 0
    if need_mask:
        cols = li * kv_tile + lax.broadcasted_iota(
            jnp.int32, (q_all.shape[0], kv_tile), 1)
        key_mask = cols < kv_len

    # ---- per-head online-softmax attention (slices of the full-width Q/K/V)
    for h in range(num_heads):
        q_h = q_all[:, h * d:(h + 1) * d]
        k_h = k_b[:, h * d:(h + 1) * d]
        v_h = v_b[:, h * d:(h + 1) * d]
        s = lax.dot_general(q_h, k_h, (((1,), (1,)), ((), ())),
                            preferred_element_type=jnp.float32)          # (ts, tl)
        if need_mask:
            s = jnp.where(key_mask, s, -jnp.inf)
        m_prev = m_sc[h]
        m_new = jnp.maximum(m_prev, jnp.max(s, axis=-1, keepdims=True))
        alpha = jnp.exp(m_prev - m_new)
        p = jnp.exp(s - m_new)
        l_sc[h] = alpha * l_sc[h] + jnp.sum(p, axis=-1, keepdims=True)
        acc_sc[h] = alpha * acc_sc[h] + jnp.dot(
            p.astype(jnp.bfloat16), v_h, preferred_element_type=jnp.float32)
        m_sc[h] = m_new

    # ---- last KV tile: normalize, concat heads, ONE wide out-proj, add to residual
    @pl.when(li == n_l - 1)
    def _():
        o_heads = []
        for h in range(num_heads):
            inv_l = pl.reciprocal(l_sc[h], approx=False)
            o_heads.append((acc_sc[h] * inv_l).astype(jnp.bfloat16))
        o = jnp.concatenate(o_heads, axis=1)                             # (ts, H*d)
        out_ref[0] = out_ref[0] + jnp.dot(o, wo_ref[...],
                                          preferred_element_type=jnp.float32)


# ----------------------------------------------------------------------------
# One-time weight fusion (exact affine composition), lane-padded, bf16 weight slabs
# ----------------------------------------------------------------------------
def fuse_params(params, num_heads):
    E = params["q_w"].shape[0]
    C = params["k_w"].shape[1]
    H = num_heads
    assert E % H == 0, "token_dim must be divisible by num_heads"
    d = E // H
    scale = 1.0 / math.sqrt(d)

    wq_in, wk_in, wv_in = jnp.split(params["attn_in_w"], 3, axis=0)
    bq_in, _bk_in, bv_in = jnp.split(params["attn_in_b"], 3, axis=0)

    with jax.default_matmul_precision("float32"):
        wq = (params["q_w"].T @ wq_in.T) * scale                 # (E, E), 1/sqrt(d) folded
        bq = (params["q_b"] @ wq_in.T + bq_in) * scale           # (E,)
        wk = params["k_w"].T @ wk_in.T                           # (C, E); K bias dropped (cancels)
        wv = params["v_w"].T @ wv_in.T                           # (C, E)
        bv = params["v_b"] @ wv_in.T + bv_in                     # (E,)
        wo = params["attn_out_w"].T @ params["out_w"].T          # (E, E)
        wres = jnp.asarray(params["out_w"].T)                    # (E, E) residual path
        bo = params["attn_out_b"] @ params["out_w"].T + params["out_b"]

    Ep = _round_up(E, 128)
    Cp = _round_up(C, 128)

    def pad2(w, rows, cols):
        return jnp.pad(w, ((0, rows - w.shape[0]), (0, cols - w.shape[1])))

    def padb(b, n):
        return jnp.pad(b, (0, n - b.shape[0])).reshape(1, n).astype(jnp.float32)

    return {
        # x @ [Wq*scale | Wres]  -> Q and residual in one matmul
        "wqres": jnp.concatenate([pad2(wq, Ep, Ep), pad2(wres, Ep, Ep)],
                                 axis=1).astype(jnp.bfloat16),           # (Ep, 2Ep)
        # cond @ [Wk | Wv] -> K,V in one matmul
        "wkv": jnp.concatenate([pad2(wk, Cp, Ep), pad2(wv, Cp, Ep)],
                               axis=1).astype(jnp.bfloat16),             # (Cp, 2Ep)
        "wo": pad2(wo, E, Ep).astype(jnp.bfloat16),                      # (H*d, Ep)
        "bq": padb(bq, Ep),
        "bv": padb(bv, Ep),
        "bo": padb(bo, Ep),
    }


# ----------------------------------------------------------------------------
# Forward wrapper: one pallas_call, weights resident in VMEM, lane-padded activations
# ----------------------------------------------------------------------------
@functools.partial(jax.jit, static_argnames=("num_heads", "q_tile", "kv_tile"))
def multihead_cross_attention(fused, tokens, cond, num_heads, q_tile=256, kv_tile=256):
    B, S, E = tokens.shape
    _, L, C = cond.shape
    H = num_heads
    d = E // H
    Ep = fused["wqres"].shape[0]
    Cp = fused["wkv"].shape[0]

    ts = min(_round_up(S, 8), q_tile)
    tl = min(_round_up(L, 8), kv_tile)
    Sp = _round_up(S, ts)
    Lp = _round_up(L, tl)

    tokens_p = jnp.pad(tokens.astype(jnp.float32),
                       ((0, 0), (0, Sp - S), (0, Ep - E)))
    cond_p = jnp.pad(cond.astype(jnp.float32),
                     ((0, 0), (0, Lp - L), (0, Cp - C)))

    kern = functools.partial(fused_mhca_kernel, num_heads=H, head_dim=d,
                             e_pad=Ep, kv_tile=tl, kv_len=L)

    def resident(shape):   # full-array block, constant index -> stays in VMEM
        nd = len(shape)
        return pl.BlockSpec(shape, lambda b, si, li, _n=nd: (0,) * _n)

    out_p = pl.pallas_call(
        kern,
        out_shape=jax.ShapeDtypeStruct((B, Sp, Ep), jnp.float32),
        grid=(B, Sp // ts, Lp // tl),
        in_specs=[
            pl.BlockSpec((1, ts, Ep), lambda b, si, li: (b, si, 0)),   # tokens tile
            pl.BlockSpec((1, tl, Cp), lambda b, si, li: (b, li, 0)),   # cond tile (streamed over L)
            resident(fused["wqres"].shape),
            resident(fused["wkv"].shape),
            resident(fused["wo"].shape),
            resident(fused["bq"].shape),
            resident(fused["bv"].shape),
            resident(fused["bo"].shape),
        ],
        out_specs=pl.BlockSpec((1, ts, Ep), lambda b, si, li: (b, si, 0)),
        scratch_shapes=[
            pltpu.VMEM((ts, Ep), jnp.bfloat16),    # Q (scaled, biased), resident across L tiles
            pltpu.VMEM((H, ts, 1), jnp.float32),   # running max
            pltpu.VMEM((H, ts, 1), jnp.float32),   # running denominator
            pltpu.VMEM((H, ts, d), jnp.float32),   # running P@V accumulator
        ],
        compiler_params=pltpu.CompilerParams(
            dimension_semantics=("parallel", "parallel", "arbitrary"),
            vmem_limit_bytes=48 * 1024 * 1024,     # fits v7x's 64 MiB VMEM with headroom
        ),
    )(tokens_p, cond_p, fused["wqres"], fused["wkv"], fused["wo"],
      fused["bq"], fused["bv"], fused["bo"])

    return out_p[:, :S, :E]


# ----------------------------------------------------------------------------
# Plain-JAX reference (unfused math, mirrors the PyTorch module exactly)
# ----------------------------------------------------------------------------
def reference_forward(params, tokens, cond, num_heads):
    B, S, E = tokens.shape
    L = cond.shape[1]
    H = num_heads
    d = E // H

    def lin(x, w, b):
        return x @ w.T + b

    with jax.default_matmul_precision("float32"):
        q = lin(tokens, params["q_w"], params["q_b"])
        k = lin(cond, params["k_w"], params["k_b"])
        v = lin(cond, params["v_w"], params["v_b"])

        wq_in, wk_in, wv_in = jnp.split(params["attn_in_w"], 3, axis=0)
        bq_in, bk_in, bv_in = jnp.split(params["attn_in_b"], 3, axis=0)
        qi = lin(q, wq_in, bq_in)
        ki = lin(k, wk_in, bk_in)
        vi = lin(v, wv_in, bv_in)

        qh = qi.reshape(B, S, H, d).transpose(0, 2, 1, 3)
        kh = ki.reshape(B, L, H, d).transpose(0, 2, 1, 3)
        vh = vi.reshape(B, L, H, d).transpose(0, 2, 1, 3)
        logits = jnp.einsum("bhsd,bhld->bhsl", qh, kh) / math.sqrt(d)
        p = jax.nn.softmax(logits, axis=-1)
        oh = jnp.einsum("bhsl,bhld->bhsd", p, vh)
        o = oh.transpose(0, 2, 1, 3).reshape(B, S, E)

        attn_out = lin(o, params["attn_out_w"], params["attn_out_b"])
        return lin(attn_out + tokens, params["out_w"], params["out_b"])


# ----------------------------------------------------------------------------
# Deterministic parameter init (PyTorch (out_features, in_features) convention)
# ----------------------------------------------------------------------------
def init_params(key, token_dim, cond_dim):
    E, C = token_dim, cond_dim
    keys = jax.random.split(key, 12)
    s = 0.02
    return {
        "q_w": s * jax.random.normal(keys[0], (E, E), jnp.float32),
        "q_b": s * jax.random.normal(keys[1], (E,), jnp.float32),
        "k_w": s * jax.random.normal(keys[2], (E, C), jnp.float32),
        "k_b": s * jax.random.normal(keys[3], (E,), jnp.float32),
        "v_w": s * jax.random.normal(keys[4], (E, C), jnp.float32),
        "v_b": s * jax.random.normal(keys[5], (E,), jnp.float32),
        "attn_in_w": s * jax.random.normal(keys[6], (3 * E, E), jnp.float32),
        "attn_in_b": s * jax.random.normal(keys[7], (3 * E,), jnp.float32),
        "attn_out_w": s * jax.random.normal(keys[8], (E, E), jnp.float32),
        "attn_out_b": s * jax.random.normal(keys[9], (E,), jnp.float32),
        "out_w": s * jax.random.normal(keys[10], (E, E), jnp.float32),
        "out_b": s * jax.random.normal(keys[11], (E,), jnp.float32),
    }


if __name__ == "__main__":
    # Small shapes consistent with the module's forward; cond_len=12 with kv_tile=8
    # and seq_len=16 with q_tile=8 deliberately exercise the multi-tile online-softmax,
    # the padded-key masking and the (B, S-tile) parallel grid at tiny sizes.
    B, S, L = 2, 16, 12
    token_dim, cond_dim, num_heads = 32, 16, 4

    key = jax.random.PRNGKey(0)
    k_par, k_tok, k_cond = jax.random.split(key, 3)

    params = init_params(k_par, token_dim, cond_dim)
    tokens = jax.random.normal(k_tok, (B, S, token_dim), jnp.float32)
    cond = jax.random.normal(k_cond, (B, L, cond_dim), jnp.float32)

    # One-time weight fusion (would live in module init in a real model).
    fused = fuse_params(params, num_heads)

    out = multihead_cross_attention(fused, tokens, cond, num_heads,
                                    q_tile=8, kv_tile=8)
    out = jax.block_until_ready(out)
    assert out.shape == (B, S, token_dim), out.shape
    assert bool(jnp.all(jnp.isfinite(out)))

    # Correctness vs. the unfused f32 plain-JAX reference (tolerance covers bf16 matmuls).
    ref = reference_forward(params, tokens, cond, num_heads)
    max_err = float(jnp.max(jnp.abs(out - ref)))
    assert bool(jnp.allclose(out, ref, atol=2e-2, rtol=2e-2)), max_err

    print("KERNEL_OK")
</pallas_src>

<mosaic_0001>
module attributes {stable_mosaic.version = 11 : i64} {
  func.func @fused_mhca_kernel(%arg0: i32, %arg1: i32, %arg2: i32, %arg3: memref<1x8x128xf32, #tpu.memory_space<vmem>>, %arg4: memref<1x8x128xf32, #tpu.memory_space<vmem>>, %arg5: memref<128x256xbf16, #tpu.memory_space<vmem>>, %arg6: memref<128x256xbf16, #tpu.memory_space<vmem>>, %arg7: memref<32x128xbf16, #tpu.memory_space<vmem>>, %arg8: memref<1x128xf32, #tpu.memory_space<vmem>>, %arg9: memref<1x128xf32, #tpu.memory_space<vmem>>, %arg10: memref<1x128xf32, #tpu.memory_space<vmem>>, %arg11: memref<1x8x128xf32, #tpu.memory_space<vmem>>, %arg12: memref<8x128xbf16, #tpu.memory_space<vmem>>, %arg13: memref<4x8x1xf32, #tpu.memory_space<vmem>>, %arg14: memref<4x8x1xf32, #tpu.memory_space<vmem>>, %arg15: memref<4x8x8xf32, #tpu.memory_space<vmem>>) attributes {dimension_semantics = [#tpu.dimension_semantics<parallel>, #tpu.dimension_semantics<parallel>, #tpu.dimension_semantics<arbitrary>], iteration_bounds = array<i64: 2, 2, 2>, scalar_prefetch = 0 : i64, scratch_operands = 4 : i64, tpu.core_type = #tpu.core_type<tc>, window_params = [{transform_indices = @transform_0, window_bounds = array<i64: 1, 8, 128>}, {transform_indices = @transform_1, window_bounds = array<i64: 1, 8, 128>}, {pipeline_mode = #tpu.pipeline_mode<synchronous>, transform_indices = @transform_2, window_bounds = array<i64: 128, 256>}, {pipeline_mode = #tpu.pipeline_mode<synchronous>, transform_indices = @transform_3, window_bounds = array<i64: 128, 256>}, {pipeline_mode = #tpu.pipeline_mode<synchronous>, transform_indices = @transform_4, window_bounds = array<i64: 32, 128>}, {pipeline_mode = #tpu.pipeline_mode<synchronous>, transform_indices = @transform_5, window_bounds = array<i64: 1, 128>}, {pipeline_mode = #tpu.pipeline_mode<synchronous>, transform_indices = @transform_6, window_bounds = array<i64: 1, 128>}, {pipeline_mode = #tpu.pipeline_mode<synchronous>, transform_indices = @transform_7, window_bounds = array<i64: 1, 128>}, {transform_indices = @transform_8, window_bounds = array<i64: 1, 8, 128>}]} {
    %c0_i32 = arith.constant 0 : i32
    %0 = arith.cmpi eq, %arg2, %c0_i32 : i32
    %1 = arith.extui %0 : i1 to i32
    %c0_i32_0 = arith.constant 0 : i32
    %2 = arith.cmpi ne, %1, %c0_i32_0 : i32
    scf.if %2 {
      %c0_99 = arith.constant 0 : index
      %c0_100 = arith.constant 0 : index
      %c0_101 = arith.constant 0 : index
      %177 = vector.load %arg3[%c0_99, %c0_100, %c0_101] : memref<1x8x128xf32, #tpu.memory_space<vmem>>, vector<1x8x128xf32>
      %178 = vector.shape_cast %177 : vector<1x8x128xf32> to vector<8x128xf32>
      %179 = arith.truncf %178 : vector<8x128xf32> to vector<8x128xbf16>
      %c0_102 = arith.constant 0 : index
      %c0_103 = arith.constant 0 : index
      %180 = vector.load %arg5[%c0_102, %c0_103] : memref<128x256xbf16, #tpu.memory_space<vmem>>, vector<128x256xbf16>
      %cst_104 = arith.constant dense<0.000000e+00> : vector<8x256xf32>
      %181 = tpu.matmul %179, %180, %cst_104 {dimension_numbers = #tpu.dot_dimension_numbers<[1], [0], [0], [1], [0, 0, 1, 1], [], []>} : vector<8x128xbf16>, vector<128x256xbf16>, vector<8x256xf32> -> vector<8x256xf32>
      %182 = vector.extract_strided_slice %181 {offsets = [0, 0], sizes = [8, 128], strides = [1, 1]} : vector<8x256xf32> to vector<8x128xf32>
      %c0_105 = arith.constant 0 : index
      %c0_106 = arith.constant 0 : index
      %183 = vector.load %arg8[%c0_105, %c0_106] : memref<1x128xf32, #tpu.memory_space<vmem>>, vector<1x128xf32>
      %184 = vector.broadcast %183 : vector<1x128xf32> to vector<8x128xf32>
      %185 = arith.addf %182, %184 : vector<8x128xf32>
      %186 = arith.truncf %185 : vector<8x128xf32> to vector<8x128xbf16>
      %c0_107 = arith.constant 0 : index
      %c0_108 = arith.constant 0 : index
      %187 = vector.load %arg12[%c0_107, %c0_108] : memref<8x128xbf16, #tpu.memory_space<vmem>>, vector<8x128xbf16>
      tpu.vector_store %arg12[%c0_107, %c0_108], %186 {strides = array<i32>} : memref<8x128xbf16, #tpu.memory_space<vmem>>, vector<8x128xbf16>,
      %188 = vector.extract_strided_slice %181 {offsets = [0, 128], sizes = [8, 128], strides = [1, 1]} : vector<8x256xf32> to vector<8x128xf32>
      %c0_109 = arith.constant 0 : index
      %c0_110 = arith.constant 0 : index
      %189 = vector.load %arg10[%c0_109, %c0_110] : memref<1x128xf32, #tpu.memory_space<vmem>>, vector<1x128xf32>
      %190 = vector.broadcast %189 : vector<1x128xf32> to vector<8x128xf32>
      %191 = arith.addf %188, %190 : vector<8x128xf32>
      %c0_111 = arith.constant 0 : index
      %c0_112 = arith.constant 0 : index
      %c0_113 = arith.constant 0 : index
      %192 = vector.load %arg11[%c0_111, %c0_112, %c0_113] : memref<1x8x128xf32, #tpu.memory_space<vmem>>, vector<1x8x128xf32>
      %193 = vector.shape_cast %192 : vector<1x8x128xf32> to vector<8x128xf32>
      %194 = vector.shape_cast %191 : vector<8x128xf32> to vector<1x8x128xf32>
      tpu.vector_store %arg11[%c0_111, %c0_112, %c0_113], %194 {strides = array<i32>} : memref<1x8x128xf32, #tpu.memory_space<vmem>>, vector<1x8x128xf32>,
      %cst_114 = arith.constant 0xFF800000 : f32
      %195 = vector.broadcast %cst_114 : f32 to vector<4x8x1xf32>
      %c0_115 = arith.constant 0 : index
      %c0_116 = arith.constant 0 : index
      %c0_117 = arith.constant 0 : index
      %196 = vector.load %arg13[%c0_115, %c0_116, %c0_117] : memref<4x8x1xf32, #tpu.memory_space<vmem>>, vector<4x8x1xf32>
      tpu.vector_store %arg13[%c0_115, %c0_116, %c0_117], %195 {strides = array<i32>} : memref<4x8x1xf32, #tpu.memory_space<vmem>>, vector<4x8x1xf32>,
      %cst_118 = arith.constant 0.000000e+00 : f32
      %197 = vector.broadcast %cst_118 : f32 to vector<4x8x1xf32>
      %c0_119 = arith.constant 0 : index
      %c0_120 = arith.constant 0 : index
      %c0_121 = arith.constant 0 : index
      %198 = vector.load %arg14[%c0_119, %c0_120, %c0_121] : memref<4x8x1xf32, #tpu.memory_space<vmem>>, vector<4x8x1xf32>
      tpu.vector_store %arg14[%c0_119, %c0_120, %c0_121], %197 {strides = array<i32>} : memref<4x8x1xf32, #tpu.memory_space<vmem>>, vector<4x8x1xf32>,
      %cst_122 = arith.constant 0.000000e+00 : f32
      %199 = vector.broadcast %cst_122 : f32 to vector<4x8x8xf32>
      %c0_123 = arith.constant 0 : index
      %c0_124 = arith.constant 0 : index
      %c0_125 = arith.constant 0 : index
      %200 = vector.load %arg15[%c0_123, %c0_124, %c0_125] : memref<4x8x8xf32, #tpu.memory_space<vmem>>, vector<4x8x8xf32>
      tpu.vector_store %arg15[%c0_123, %c0_124, %c0_125], %199 {strides = array<i32>} : memref<4x8x8xf32, #tpu.memory_space<vmem>>, vector<4x8x8xf32>,
    } else {
    }
    %c0 = arith.constant 0 : index
    %c0_1 = arith.constant 0 : index
    %c0_2 = arith.constant 0 : index
    %3 = vector.load %arg4[%c0, %c0_1, %c0_2] : memref<1x8x128xf32, #tpu.memory_space<vmem>>, vector<1x8x128xf32>
    %4 = vector.shape_cast %3 : vector<1x8x128xf32> to vector<8x128xf32>
    %5 = arith.truncf %4 : vector<8x128xf32> to vector<8x128xbf16>
    %c0_3 = arith.constant 0 : index
    %c0_4 = arith.constant 0 : index
    %6 = vector.load %arg6[%c0_3, %c0_4] : memref<128x256xbf16, #tpu.memory_space<vmem>>, vector<128x256xbf16>
    %cst = arith.constant dense<0.000000e+00> : vector<8x256xf32>
    %7 = tpu.matmul %5, %6, %cst {dimension_numbers = #tpu.dot_dimension_numbers<[1], [0], [0], [1], [0, 0, 1, 1], [], []>} : vector<8x128xbf16>, vector<128x256xbf16>, vector<8x256xf32> -> vector<8x256xf32>
    %8 = vector.extract_strided_slice %7 {offsets = [0, 0], sizes = [8, 128], strides = [1, 1]} : vector<8x256xf32> to vector<8x128xf32>
    %9 = arith.truncf %8 : vector<8x128xf32> to vector<8x128xbf16>
    %10 = vector.extract_strided_slice %7 {offsets = [0, 128], sizes = [8, 128], strides = [1, 1]} : vector<8x256xf32> to vector<8x128xf32>
    %c0_5 = arith.constant 0 : index
    %c0_6 = arith.constant 0 : index
    %11 = vector.load %arg9[%c0_5, %c0_6] : memref<1x128xf32, #tpu.memory_space<vmem>>, vector<1x128xf32>
    %12 = vector.broadcast %11 : vector<1x128xf32> to vector<8x128xf32>
    %13 = arith.addf %10, %12 : vector<8x128xf32>
    %14 = arith.truncf %13 : vector<8x128xf32> to vector<8x128xbf16>
    %c0_7 = arith.constant 0 : index
    %c0_8 = arith.constant 0 : index
    %15 = vector.load %arg12[%c0_7, %c0_8] : memref<8x128xbf16, #tpu.memory_space<vmem>>, vector<8x128xbf16>
    %c8_i32 = arith.constant 8 : i32
    %16 = arith.muli %arg2, %c8_i32 : i32
    %17 = tpu.iota {dimensions = array<i32: 1>} : vector<8x8xi32>
    %18 = vector.broadcast %16 : i32 to vector<8x8xi32>
    %19 = arith.addi %18, %17 : vector<8x8xi32>
    %c12_i32 = arith.constant 12 : i32
    %20 = vector.broadcast %c12_i32 : i32 to vector<8x8xi32>
    %21 = arith.cmpi slt, %19, %20 : vector<8x8xi32>
    %22 = vector.extract_strided_slice %15 {offsets = [0, 0], sizes = [8, 8], strides = [1, 1]} : vector<8x128xbf16> to vector<8x8xbf16>
    %23 = vector.extract_strided_slice %9 {offsets = [0, 0], sizes = [8, 8], strides = [1, 1]} : vector<8x128xbf16> to vector<8x8xbf16>
    %24 = vector.extract_strided_slice %14 {offsets = [0, 0], sizes = [8, 8], strides = [1, 1]} : vector<8x128xbf16> to vector<8x8xbf16>
    %cst_9 = arith.constant dense<0.000000e+00> : vector<8x8xf32>
    %25 = tpu.matmul %22, %23, %cst_9 {dimension_numbers = #tpu.dot_dimension_numbers<[1], [1], [0], [0], [0, 0, 1, 0], [], []>} : vector<8x8xbf16>, vector<8x8xbf16>, vector<8x8xf32> -> vector<8x8xf32>
    %cst_10 = arith.constant 0xFF800000 : f32
    %26 = vector.broadcast %cst_10 : f32 to vector<8x8xf32>
    %27 = arith.select %21, %25, %26 : vector<8x8xi1>, vector<8x8xf32>
    %c0_11 = arith.constant 0 : index
    %c0_12 = arith.constant 0 : index
    %c0_13 = arith.constant 0 : index
    %28 = vector.load %arg13[%c0_11, %c0_12, %c0_13] : memref<4x8x1xf32, #tpu.memory_space<vmem>>, vector<1x8x1xf32>
    %29 = vector.shape_cast %28 : vector<1x8x1xf32> to vector<8x1xf32>
    %cst_14 = arith.constant dense<0xFF800000> : vector<8xf32>
    %30 = vector.multi_reduction <maximumf>, %27, %cst_14 [1] : vector<8x8xf32> to vector<8xf32>
    %31 = vector.shape_cast %30 : vector<8xf32> to vector<8x1xf32>
    %32 = arith.maximumf %29, %31 : vector<8x1xf32>
    %33 = arith.subf %29, %32 : vector<8x1xf32>
    %34 = math.exp %33 : vector<8x1xf32>
    %35 = vector.broadcast %32 : vector<8x1xf32> to vector<8x8xf32>
    %36 = arith.subf %27, %35 : vector<8x8xf32>
    %37 = math.exp %36 : vector<8x8xf32>
    %c0_15 = arith.constant 0 : index
    %c0_16 = arith.constant 0 : index
    %c0_17 = arith.constant 0 : index
    %38 = vector.load %arg14[%c0_15, %c0_16, %c0_17] : memref<4x8x1xf32, #tpu.memory_space<vmem>>, vector<1x8x1xf32>
    %39 = vector.shape_cast %38 : vector<1x8x1xf32> to vector<8x1xf32>
    %40 = arith.mulf %34, %39 : vector<8x1xf32>
    %cst_18 = arith.constant dense<0.000000e+00> : vector<8xf32>
    %41 = vector.multi_reduction <add>, %37, %cst_18 [1] : vector<8x8xf32> to vector<8xf32>
    %42 = vector.shape_cast %41 : vector<8xf32> to vector<8x1xf32>
    %43 = arith.addf %40, %42 : vector<8x1xf32>
    %c0_19 = arith.constant 0 : index
    %c0_20 = arith.constant 0 : index
    %c0_21 = arith.constant 0 : index
    %44 = vector.load %arg14[%c0_19, %c0_20, %c0_21] : memref<4x8x1xf32, #tpu.memory_space<vmem>>, vector<1x8x1xf32>
    %45 = vector.shape_cast %44 : vector<1x8x1xf32> to vector<8x1xf32>
    %46 = vector.shape_cast %43 : vector<8x1xf32> to vector<1x8x1xf32>
    tpu.vector_store %arg14[%c0_19, %c0_20, %c0_21], %46 {strides = array<i32>} : memref<4x8x1xf32, #tpu.memory_space<vmem>>, vector<1x8x1xf32>,
    %c0_22 = arith.constant 0 : index
    %c0_23 = arith.constant 0 : index
    %c0_24 = arith.constant 0 : index
    %47 = vector.load %arg15[%c0_22, %c0_23, %c0_24] : memref<4x8x8xf32, #tpu.memory_space<vmem>>, vector<1x8x8xf32>
    %48 = vector.shape_cast %47 : vector<1x8x8xf32> to vector<8x8xf32>
    %49 = vector.broadcast %34 : vector<8x1xf32> to vector<8x8xf32>
    %50 = arith.mulf %49, %48 : vector<8x8xf32>
    %51 = arith.truncf %37 : vector<8x8xf32> to vector<8x8xbf16>
    %cst_25 = arith.constant dense<0.000000e+00> : vector<8x8xf32>
    %52 = tpu.matmul %51, %24, %cst_25 {dimension_numbers = #tpu.dot_dimension_numbers<[1], [0], [0], [1], [0, 0, 1, 1], [], []>} : vector<8x8xbf16>, vector<8x8xbf16>, vector<8x8xf32> -> vector<8x8xf32>
    %53 = arith.addf %50, %52 : vector<8x8xf32>
    %c0_26 = arith.constant 0 : index
    %c0_27 = arith.constant 0 : index
    %c0_28 = arith.constant 0 : index
    %54 = vector.load %arg15[%c0_26, %c0_27, %c0_28] : memref<4x8x8xf32, #tpu.memory_space<vmem>>, vector<1x8x8xf32>
    %55 = vector.shape_cast %54 : vector<1x8x8xf32> to vector<8x8xf32>
    %56 = vector.shape_cast %53 : vector<8x8xf32> to vector<1x8x8xf32>
    tpu.vector_store %arg15[%c0_26, %c0_27, %c0_28], %56 {strides = array<i32>} : memref<4x8x8xf32, #tpu.memory_space<vmem>>, vector<1x8x8xf32>,
    %c0_29 = arith.constant 0 : index
    %c0_30 = arith.constant 0 : index
    %c0_31 = arith.constant 0 : index
    %57 = vector.load %arg13[%c0_29, %c0_30, %c0_31] : memref<4x8x1xf32, #tpu.memory_space<vmem>>, vector<1x8x1xf32>
    %58 = vector.shape_cast %57 : vector<1x8x1xf32> to vector<8x1xf32>
    %59 = vector.shape_cast %32 : vector<8x1xf32> to vector<1x8x1xf32>
    tpu.vector_store %arg13[%c0_29, %c0_30, %c0_31], %59 {strides = array<i32>} : memref<4x8x1xf32, #tpu.memory_space<vmem>>, vector<1x8x1xf32>,
    %60 = vector.extract_strided_slice %15 {offsets = [0, 8], sizes = [8, 8], strides = [1, 1]} : vector<8x128xbf16> to vector<8x8xbf16>
    %61 = vector.extract_strided_slice %9 {offsets = [0, 8], sizes = [8, 8], strides = [1, 1]} : vector<8x128xbf16> to vector<8x8xbf16>
    %62 = vector.extract_strided_slice %14 {offsets = [0, 8], sizes = [8, 8], strides = [1, 1]} : vector<8x128xbf16> to vector<8x8xbf16>
    %cst_32 = arith.constant dense<0.000000e+00> : vector<8x8xf32>
    %63 = tpu.matmul %60, %61, %cst_32 {dimension_numbers = #tpu.dot_dimension_numbers<[1], [1], [0], [0], [0, 0, 1, 0], [], []>} : vector<8x8xbf16>, vector<8x8xbf16>, vector<8x8xf32> -> vector<8x8xf32>
    %cst_33 = arith.constant 0xFF800000 : f32
    %64 = vector.broadcast %cst_33 : f32 to vector<8x8xf32>
    %65 = arith.select %21, %63, %64 : vector<8x8xi1>, vector<8x8xf32>
    %c1 = arith.constant 1 : index
    %c0_34 = arith.constant 0 : index
    %c0_35 = arith.constant 0 : index
    %66 = vector.load %arg13[%c1, %c0_34, %c0_35] : memref<4x8x1xf32, #tpu.memory_space<vmem>>, vector<1x8x1xf32>
    %67 = vector.shape_cast %66 : vector<1x8x1xf32> to vector<8x1xf32>
    %cst_36 = arith.constant dense<0xFF800000> : vector<8xf32>
    %68 = vector.multi_reduction <maximumf>, %65, %cst_36 [1] : vector<8x8xf32> to vector<8xf32>
    %69 = vector.shape_cast %68 : vector<8xf32> to vector<8x1xf32>
    %70 = arith.maximumf %67, %69 : vector<8x1xf32>
    %71 = arith.subf %67, %70 : vector<8x1xf32>
    %72 = math.exp %71 : vector<8x1xf32>
    %73 = vector.broadcast %70 : vector<8x1xf32> to vector<8x8xf32>
    %74 = arith.subf %65, %73 : vector<8x8xf32>
    %75 = math.exp %74 : vector<8x8xf32>
    %c1_37 = arith.constant 1 : index
    %c0_38 = arith.constant 0 : index
    %c0_39 = arith.constant 0 : index
    %76 = vector.load %arg14[%c1_37, %c0_38, %c0_39] : memref<4x8x1xf32, #tpu.memory_space<vmem>>, vector<1x8x1xf32>
    %77 = vector.shape_cast %76 : vector<1x8x1xf32> to vector<8x1xf32>
    %78 = arith.mulf %72, %77 : vector<8x1xf32>
    %cst_40 = arith.constant dense<0.000000e+00> : vector<8xf32>
    %79 = vector.multi_reduction <add>, %75, %cst_40 [1] : vector<8x8xf32> to vector<8xf32>
    %80 = vector.shape_cast %79 : vector<8xf32> to vector<8x1xf32>
    %81 = arith.addf %78, %80 : vector<8x1xf32>
    %c1_41 = arith.constant 1 : index
    %c0_42 = arith.constant 0 : index
    %c0_43 = arith.constant 0 : index
    %82 = vector.load %arg14[%c1_41, %c0_42, %c0_43] : memref<4x8x1xf32, #tpu.memory_space<vmem>>, vector<1x8x1xf32>
    %83 = vector.shape_cast %82 : vector<1x8x1xf32> to vector<8x1xf32>
    %84 = vector.shape_cast %81 : vector<8x1xf32> to vector<1x8x1xf32>
    tpu.vector_store %arg14[%c1_41, %c0_42, %c0_43], %84 {strides = array<i32>} : memref<4x8x1xf32, #tpu.memory_space<vmem>>, vector<1x8x1xf32>,
    %c1_44 = arith.constant 1 : index
    %c0_45 = arith.constant 0 : index
    %c0_46 = arith.constant 0 : index
    %85 = vector.load %arg15[%c1_44, %c0_45, %c0_46] : memref<4x8x8xf32, #tpu.memory_space<vmem>>, vector<1x8x8xf32>
    %86 = vector.shape_cast %85 : vector<1x8x8xf32> to vector<8x8xf32>
    %87 = vector.broadcast %72 : vector<8x1xf32> to vector<8x8xf32>
    %88 = arith.mulf %87, %86 : vector<8x8xf32>
    %89 = arith.truncf %75 : vector<8x8xf32> to vector<8x8xbf16>
    %cst_47 = arith.constant dense<0.000000e+00> : vector<8x8xf32>
    %90 = tpu.matmul %89, %62, %cst_47 {dimension_numbers = #tpu.dot_dimension_numbers<[1], [0], [0], [1], [0, 0, 1, 1], [], []>} : vector<8x8xbf16>, vector<8x8xbf16>, vector<8x8xf32> -> vector<8x8xf32>
    %91 = arith.addf %88, %90 : vector<8x8xf32>
    %c1_48 = arith.constant 1 : index
    %c0_49 = arith.constant 0 : index
    %c0_50 = arith.constant 0 : index
    %92 = vector.load %arg15[%c1_48, %c0_49, %c0_50] : memref<4x8x8xf32, #tpu.memory_space<vmem>>, vector<1x8x8xf32>
    %93 = vector.shape_cast %92 : vector<1x8x8xf32> to vector<8x8xf32>
    %94 = vector.shape_cast %91 : vector<8x8xf32> to vector<1x8x8xf32>
    tpu.vector_store %arg15[%c1_48, %c0_49, %c0_50], %94 {strides = array<i32>} : memref<4x8x8xf32, #tpu.memory_space<vmem>>, vector<1x8x8xf32>,
    %c1_51 = arith.constant 1 : index
    %c0_52 = arith.constant 0 : index
    %c0_53 = arith.constant 0 : index
    %95 = vector.load %arg13[%c1_51, %c0_52, %c0_53] : memref<4x8x1xf32, #tpu.memory_space<vmem>>, vector<1x8x1xf32>
    %96 = vector.shape_cast %95 : vector<1x8x1xf32> to vector<8x1xf32>
    %97 = vector.shape_cast %70 : vector<8x1xf32> to vector<1x8x1xf32>
    tpu.vector_store %arg13[%c1_51, %c0_52, %c0_53], %97 {strides = array<i32>} : memref<4x8x1xf32, #tpu.memory_space<vmem>>, vector<1x8x1xf32>,
    %98 = vector.extract_strided_slice %15 {offsets = [0, 16], sizes = [8, 8], strides = [1, 1]} : vector<8x128xbf16> to vector<8x8xbf16>
    %99 = vector.extract_strided_slice %9 {offsets = [0, 16], sizes = [8, 8], strides = [1, 1]} : vector<8x128xbf16> to vector<8x8xbf16>
    %100 = vector.extract_strided_slice %14 {offsets = [0, 16], sizes = [8, 8], strides = [1, 1]} : vector<8x128xbf16> to vector<8x8xbf16>
    %cst_54 = arith.constant dense<0.000000e+00> : vector<8x8xf32>
    %101 = tpu.matmul %98, %99, %cst_54 {dimension_numbers = #tpu.dot_dimension_numbers<[1], [1], [0], [0], [0, 0, 1, 0], [], []>} : vector<8x8xbf16>, vector<8x8xbf16>, vector<8x8xf32> -> vector<8x8xf32>
    %cst_55 = arith.constant 0xFF800000 : f32
    %102 = vector.broadcast %cst_55 : f32 to vector<8x8xf32>
    %103 = arith.select %21, %101, %102 : vector<8x8xi1>, vector<8x8xf32>
    %c2 = arith.constant 2 : index
    %c0_56 = arith.constant 0 : index
    %c0_57 = arith.constant 0 : index
    %104 = vector.load %arg13[%c2, %c0_56, %c0_57] : memref<4x8x1xf32, #tpu.memory_space<vmem>>, vector<1x8x1xf32>
    %105 = vector.shape_cast %104 : vector<1x8x1xf32> to vector<8x1xf32>
    %cst_58 = arith.constant dense<0xFF800000> : vector<8xf32>
    %106 = vector.multi_reduction <maximumf>, %103, %cst_58 [1] : vector<8x8xf32> to vector<8xf32>
    %107 = vector.shape_cast %106 : vector<8xf32> to vector<8x1xf32>
    %108 = arith.maximumf %105, %107 : vector<8x1xf32>
    %109 = arith.subf %105, %108 : vector<8x1xf32>
    %110 = math.exp %109 : vector<8x1xf32>
    %111 = vector.broadcast %108 : vector<8x1xf32> to vector<8x8xf32>
    %112 = arith.subf %103, %111 : vector<8x8xf32>
    %113 = math.exp %112 : vector<8x8xf32>
    %c2_59 = arith.constant 2 : index
    %c0_60 = arith.constant 0 : index
    %c0_61 = arith.constant 0 : index
    %114 = vector.load %arg14[%c2_59, %c0_60, %c0_61] : memref<4x8x1xf32, #tpu.memory_space<vmem>>, vector<1x8x1xf32>
    %115 = vector.shape_cast %114 : vector<1x8x1xf32> to vector<8x1xf32>
    %116 = arith.mulf %110, %115 : vector<8x1xf32>
    %cst_62 = arith.constant dense<0.000000e+00> : vector<8xf32>
    %117 = vector.multi_reduction <add>, %113, %cst_62 [1] : vector<8x8xf32> to vector<8xf32>
    %118 = vector.shape_cast %117 : vector<8xf32> to vector<8x1xf32>
    %119 = arith.addf %116, %118 : vector<8x1xf32>
    %c2_63 = arith.constant 2 : index
    %c0_64 = arith.constant 0 : index
    %c0_65 = arith.constant 0 : index
    %120 = vector.load %arg14[%c2_63, %c0_64, %c0_65] : memref<4x8x1xf32, #tpu.memory_space<vmem>>, vector<1x8x1xf32>
    %121 = vector.shape_cast %120 : vector<1x8x1xf32> to vector<8x1xf32>
    %122 = vector.shape_cast %119 : vector<8x1xf32> to vector<1x8x1xf32>
    tpu.vector_store %arg14[%c2_63, %c0_64, %c0_65], %122 {strides = array<i32>} : memref<4x8x1xf32, #tpu.memory_space<vmem>>, vector<1x8x1xf32>,
    %c2_66 = arith.constant 2 : index
    %c0_67 = arith.constant 0 : index
    %c0_68 = arith.constant 0 : index
    %123 = vector.load %arg15[%c2_66, %c0_67, %c0_68] : memref<4x8x8xf32, #tpu.memory_space<vmem>>, vector<1x8x8xf32>
    %124 = vector.shape_cast %123 : vector<1x8x8xf32> to vector<8x8xf32>
    %125 = vector.broadcast %110 : vector<8x1xf32> to vector<8x8xf32>
    %126 = arith.mulf %125, %124 : vector<8x8xf32>
    %127 = arith.truncf %113 : vector<8x8xf32> to vector<8x8xbf16>
    %cst_69 = arith.constant dense<0.000000e+00> : vector<8x8xf32>
    %128 = tpu.matmul %127, %100, %cst_69 {dimension_numbers = #tpu.dot_dimension_numbers<[1], [0], [0], [1], [0, 0, 1, 1], [], []>} : vector<8x8xbf16>, vector<8x8xbf16>, vector<8x8xf32> -> vector<8x8xf32>
    %129 = arith.addf %126, %128 : vector<8x8xf32>
    %c2_70 = arith.constant 2 : index
    %c0_71 = arith.constant 0 : index
    %c0_72 = arith.constant 0 : index
    %130 = vector.load %arg15[%c2_70, %c0_71, %c0_72] : memref<4x8x8xf32, #tpu.memory_space<vmem>>, vector<1x8x8xf32>
    %131 = vector.shape_cast %130 : vector<1x8x8xf32> to vector<8x8xf32>
    %132 = vector.shape_cast %129 : vector<8x8xf32> to vector<1x8x8xf32>
    tpu.vector_store %arg15[%c2_70, %c0_71, %c0_72], %132 {strides = array<i32>} : memref<4x8x8xf32, #tpu.memory_space<vmem>>, vector<1x8x8xf32>,
    %c2_73 = arith.constant 2 : index
    %c0_74 = arith.constant 0 : index
    %c0_75 = arith.constant 0 : index
    %133 = vector.load %arg13[%c2_73, %c0_74, %c0_75] : memref<4x8x1xf32, #tpu.memory_space<vmem>>, vector<1x8x1xf32>
    %134 = vector.shape_cast %133 : vector<1x8x1xf32> to vector<8x1xf32>
    %135 = vector.shape_cast %108 : vector<8x1xf32> to vector<1x8x1xf32>
    tpu.vector_store %arg13[%c2_73, %c0_74, %c0_75], %135 {strides = array<i32>} : memref<4x8x1xf32, #tpu.memory_space<vmem>>, vector<1x8x1xf32>,
    %136 = vector.extract_strided_slice %15 {offsets = [0, 24], sizes = [8, 8], strides = [1, 1]} : vector<8x128xbf16> to vector<8x8xbf16>
    %137 = vector.extract_strided_slice %9 {offsets = [0, 24], sizes = [8, 8], strides = [1, 1]} : vector<8x128xbf16> to vector<8x8xbf16>
    %138 = vector.extract_strided_slice %14 {offsets = [0, 24], sizes = [8, 8], strides = [1, 1]} : vector<8x128xbf16> to vector<8x8xbf16>
    %cst_76 = arith.constant dense<0.000000e+00> : vector<8x8xf32>
    %139 = tpu.matmul %136, %137, %cst_76 {dimension_numbers = #tpu.dot_dimension_numbers<[1], [1], [0], [0], [0, 0, 1, 0], [], []>} : vector<8x8xbf16>, vector<8x8xbf16>, vector<8x8xf32> -> vector<8x8xf32>
    %cst_77 = arith.constant 0xFF800000 : f32
    %140 = vector.broadcast %cst_77 : f32 to vector<8x8xf32>
    %141 = arith.select %21, %139, %140 : vector<8x8xi1>, vector<8x8xf32>
    %c3 = arith.constant 3 : index
    %c0_78 = arith.constant 0 : index
    %c0_79 = arith.constant 0 : index
    %142 = vector.load %arg13[%c3, %c0_78, %c0_79] : memref<4x8x1xf32, #tpu.memory_space<vmem>>, vector<1x8x1xf32>
    %143 = vector.shape_cast %142 : vector<1x8x1xf32> to vector<8x1xf32>
    %cst_80 = arith.constant dense<0xFF800000> : vector<8xf32>
    %144 = vector.multi_reduction <maximumf>, %141, %cst_80 [1] : vector<8x8xf32> to vector<8xf32>
    %145 = vector.shape_cast %144 : vector<8xf32> to vector<8x1xf32>
    %146 = arith.maximumf %143, %145 : vector<8x1xf32>
    %147 = arith.subf %143, %146 : vector<8x1xf32>
    %148 = math.exp %147 : vector<8x1xf32>
    %149 = vector.broadcast %146 : vector<8x1xf32> to vector<8x8xf32>
    %150 = arith.subf %141, %149 : vector<8x8xf32>
    %151 = math.exp %150 : vector<8x8xf32>
    %c3_81 = arith.constant 3 : index
    %c0_82 = arith.constant 0 : index
    %c0_83 = arith.constant 0 : index
    %152 = vector.load %arg14[%c3_81, %c0_82, %c0_83] : memref<4x8x1xf32, #tpu.memory_space<vmem>>, vector<1x8x1xf32>
    %153 = vector.shape_cast %152 : vector<1x8x1xf32> to vector<8x1xf32>
    %154 = arith.mulf %148, %153 : vector<8x1xf32>
    %cst_84 = arith.constant dense<0.000000e+00> : vector<8xf32>
    %155 = vector.multi_reduction <add>, %151, %cst_84 [1] : vector<8x8xf32> to vector<8xf32>
    %156 = vector.shape_cast %155 : vector<8xf32> to vector<8x1xf32>
    %157 = arith.addf %154, %156 : vector<8x1xf32>
    %c3_85 = arith.constant 3 : index
    %c0_86 = arith.constant 0 : index
    %c0_87 = arith.constant 0 : index
    %158 = vector.load %arg14[%c3_85, %c0_86, %c0_87] : memref<4x8x1xf32, #tpu.memory_space<vmem>>, vector<1x8x1xf32>
    %159 = vector.shape_cast %158 : vector<1x8x1xf32> to vector<8x1xf32>
    %160 = vector.shape_cast %157 : vector<8x1xf32> to vector<1x8x1xf32>
    tpu.vector_store %arg14[%c3_85, %c0_86, %c0_87], %160 {strides = array<i32>} : memref<4x8x1xf32, #tpu.memory_space<vmem>>, vector<1x8x1xf32>,
    %c3_88 = arith.constant 3 : index
    %c0_89 = arith.constant 0 : index
    %c0_90 = arith.constant 0 : index
    %161 = vector.load %arg15[%c3_88, %c0_89, %c0_90] : memref<4x8x8xf32, #tpu.memory_space<vmem>>, vector<1x8x8xf32>
    %162 = vector.shape_cast %161 : vector<1x8x8xf32> to vector<8x8xf32>
    %163 = vector.broadcast %148 : vector<8x1xf32> to vector<8x8xf32>
    %164 = arith.mulf %163, %162 : vector<8x8xf32>
    %165 = arith.truncf %151 : vector<8x8xf32> to vector<8x8xbf16>
    %cst_91 = arith.constant dense<0.000000e+00> : vector<8x8xf32>
    %166 = tpu.matmul %165, %138, %cst_91 {dimension_numbers = #tpu.dot_dimension_numbers<[1], [0], [0], [1], [0, 0, 1, 1], [], []>} : vector<8x8xbf16>, vector<8x8xbf16>, vector<8x8xf32> -> vector<8x8xf32>
    %167 = arith.addf %164, %166 : vector<8x8xf32>
    %c3_92 = arith.constant 3 : index
    %c0_93 = arith.constant 0 : index
    %c0_94 = arith.constant 0 : index
    %168 = vector.load %arg15[%c3_92, %c0_93, %c0_94] : memref<4x8x8xf32, #tpu.memory_space<vmem>>, vector<1x8x8xf32>
    %169 = vector.shape_cast %168 : vector<1x8x8xf32> to vector<8x8xf32>
    %170 = vector.shape_cast %167 : vector<8x8xf32> to vector<1x8x8xf32>
    tpu.vector_store %arg15[%c3_92, %c0_93, %c0_94], %170 {strides = array<i32>} : memref<4x8x8xf32, #tpu.memory_space<vmem>>, vector<1x8x8xf32>,
    %c3_95 = arith.constant 3 : index
    %c0_96 = arith.constant 0 : index
    %c0_97 = arith.constant 0 : index
    %171 = vector.load %arg13[%c3_95, %c0_96, %c0_97] : memref<4x8x1xf32, #tpu.memory_space<vmem>>, vector<1x8x1xf32>
    %172 = vector.shape_cast %171 : vector<1x8x1xf32> to vector<8x1xf32>
    %173 = vector.shape_cast %146 : vector<8x1xf32> to vector<1x8x1xf32>
    tpu.vector_store %arg13[%c3_95, %c0_96, %c0_97], %173 {strides = array<i32>} : memref<4x8x1xf32, #tpu.memory_space<vmem>>, vector<1x8x1xf32>,
    %c1_i32 = arith.constant 1 : i32
    %174 = arith.cmpi eq, %arg2, %c1_i32 : i32
    %175 = arith.extui %174 : i1 to i32
    %c0_i32_98 = arith.constant 0 : i32
    %176 = arith.cmpi ne, %175, %c0_i32_98 : i32
    scf.if %176 {
      %c0_99 = arith.constant 0 : index
      %c0_100 = arith.constant 0 : index
      %c0_101 = arith.constant 0 : index
      %177 = vector.load %arg14[%c0_99, %c0_100, %c0_101] : memref<4x8x1xf32, #tpu.memory_space<vmem>>, vector<1x8x1xf32>
      %178 = vector.shape_cast %177 : vector<1x8x1xf32> to vector<8x1xf32>
      %179 = tpu.reciprocal %178 : vector<8x1xf32> -> vector<8x1xf32>
      %c0_102 = arith.constant 0 : index
      %c0_103 = arith.constant 0 : index
      %c0_104 = arith.constant 0 : index
      %180 = vector.load %arg15[%c0_102, %c0_103, %c0_104] : memref<4x8x8xf32, #tpu.memory_space<vmem>>, vector<1x8x8xf32>
      %181 = vector.shape_cast %180 : vector<1x8x8xf32> to vector<8x8xf32>
      %182 = vector.broadcast %179 : vector<8x1xf32> to vector<8x8xf32>
      %183 = arith.mulf %181, %182 : vector<8x8xf32>
      %184 = arith.truncf %183 : vector<8x8xf32> to vector<8x8xbf16>
      %c1_105 = arith.constant 1 : index
      %c0_106 = arith.constant 0 : index
      %c0_107 = arith.constant 0 : index
      %185 = vector.load %arg14[%c1_105, %c0_106, %c0_107] : memref<4x8x1xf32, #tpu.memory_space<vmem>>, vector<1x8x1xf32>
      %186 = vector.shape_cast %185 : vector<1x8x1xf32> to vector<8x1xf32>
      %187 = tpu.reciprocal %186 : vector<8x1xf32> -> vector<8x1xf32>
      %c1_108 = arith.constant 1 : index
      %c0_109 = arith.constant 0 : index
      %c0_110 = arith.constant 0 : index
      %188 = vector.load %arg15[%c1_108, %c0_109, %c0_110] : memref<4x8x8xf32, #tpu.memory_space<vmem>>, vector<1x8x8xf32>
      %189 = vector.shape_cast %188 : vector<1x8x8xf32> to vector<8x8xf32>
      %190 = vector.broadcast %187 : vector<8x1xf32> to vector<8x8xf32>
      %191 = arith.mulf %189, %190 : vector<8x8xf32>
      %192 = arith.truncf %191 : vector<8x8xf32> to vector<8x8xbf16>
      %c2_111 = arith.constant 2 : index
      %c0_112 = arith.constant 0 : index
      %c0_113 = arith.constant 0 : index
      %193 = vector.load %arg14[%c2_111, %c0_112, %c0_113] : memref<4x8x1xf32, #tpu.memory_space<vmem>>, vector<1x8x1xf32>
      %194 = vector.shape_cast %193 : vector<1x8x1xf32> to vector<8x1xf32>
      %195 = tpu.reciprocal %194 : vector<8x1xf32> -> vector<8x1xf32>
      %c2_114 = arith.constant 2 : index
      %c0_115 = arith.constant 0 : index
      %c0_116 = arith.constant 0 : index
      %196 = vector.load %arg15[%c2_114, %c0_115, %c0_116] : memref<4x8x8xf32, #tpu.memory_space<vmem>>, vector<1x8x8xf32>
      %197 = vector.shape_cast %196 : vector<1x8x8xf32> to vector<8x8xf32>
      %198 = vector.broadcast %195 : vector<8x1xf32> to vector<8x8xf32>
      %199 = arith.mulf %197, %198 : vector<8x8xf32>
      %200 = arith.truncf %199 : vector<8x8xf32> to vector<8x8xbf16>
      %c3_117 = arith.constant 3 : index
      %c0_118 = arith.constant 0 : index
      %c0_119 = arith.constant 0 : index
      %201 = vector.load %arg14[%c3_117, %c0_118, %c0_119] : memref<4x8x1xf32, #tpu.memory_space<vmem>>, vector<1x8x1xf32>
      %202 = vector.shape_cast %201 : vector<1x8x1xf32> to vector<8x1xf32>
      %203 = tpu.reciprocal %202 : vector<8x1xf32> -> vector<8x1xf32>
      %c3_120 = arith.constant 3 : index
      %c0_121 = arith.constant 0 : index
      %c0_122 = arith.constant 0 : index
      %204 = vector.load %arg15[%c3_120, %c0_121, %c0_122] : memref<4x8x8xf32, #tpu.memory_space<vmem>>, vector<1x8x8xf32>
      %205 = vector.shape_cast %204 : vector<1x8x8xf32> to vector<8x8xf32>
      %206 = vector.broadcast %203 : vector<8x1xf32> to vector<8x8xf32>
      %207 = arith.mulf %205, %206 : vector<8x8xf32>
      %208 = arith.truncf %207 : vector<8x8xf32> to vector<8x8xbf16>
      %209 = tpu.concatenate %184, %192, %200, %208 in 1 : vector<8x8xbf16>, vector<8x8xbf16>, vector<8x8xbf16>, vector<8x8xbf16> -> vector<8x32xbf16>
      %c0_123 = arith.constant 0 : index
      %c0_124 = arith.constant 0 : index
      %c0_125 = arith.constant 0 : index
      %210 = vector.load %arg11[%c0_123, %c0_124, %c0_125] : memref<1x8x128xf32, #tpu.memory_space<vmem>>, vector<1x8x128xf32>
      %211 = vector.shape_cast %210 : vector<1x8x128xf32> to vector<8x128xf32>
      %c0_126 = arith.constant 0 : index
      %c0_127 = arith.constant 0 : index
      %212 = vector.load %arg7[%c0_126, %c0_127] : memref<32x128xbf16, #tpu.memory_space<vmem>>, vector<32x128xbf16>
      %cst_128 = arith.constant dense<0.000000e+00> : vector<8x128xf32>
      %213 = tpu.matmul %209, %212, %cst_128 {dimension_numbers = #tpu.dot_dimension_numbers<[1], [0], [0], [1], [0, 0, 1, 1], [], []>} : vector<8x32xbf16>, vector<32x128xbf16>, vector<8x128xf32> -> vector<8x128xf32>
      %214 = arith.addf %211, %213 : vector<8x128xf32>
      %c0_129 = arith.constant 0 : index
      %c0_130 = arith.constant 0 : index
      %c0_131 = arith.constant 0 : index
      %215 = vector.load %arg11[%c0_129, %c0_130, %c0_131] : memref<1x8x128xf32, #tpu.memory_space<vmem>>, vector<1x8x128xf32>
      %216 = vector.shape_cast %215 : vector<1x8x128xf32> to vector<8x128xf32>
      %217 = vector.shape_cast %214 : vector<8x128xf32> to vector<1x8x128xf32>
      tpu.vector_store %arg11[%c0_129, %c0_130, %c0_131], %217 {strides = array<i32>} : memref<1x8x128xf32, #tpu.memory_space<vmem>>, vector<1x8x128xf32>,
    } else {
    }
    return
  }
  func.func @transform_0(%arg0: i32, %arg1: i32, %arg2: i32) -> (i32, i32, i32) {
    %c0_i32 = arith.constant 0 : i32
    %c0_i32_0 = arith.constant 0 : i32
    return %arg0, %arg1, %c0_i32 : i32, i32, i32
  }
  func.func @transform_1(%arg0: i32, %arg1: i32, %arg2: i32) -> (i32, i32, i32) {
    %c0_i32 = arith.constant 0 : i32
    %c0_i32_0 = arith.constant 0 : i32
    return %arg0, %arg2, %c0_i32 : i32, i32, i32
  }
  func.func @transform_2(%arg0: i32, %arg1: i32, %arg2: i32) -> (i32, i32) {
    %c0_i32 = arith.constant 0 : i32
    %c0_i32_0 = arith.constant 0 : i32
    %c0_i32_1 = arith.constant 0 : i32
    return %c0_i32, %c0_i32_0 : i32, i32
  }
  func.func @transform_3(%arg0: i32, %arg1: i32, %arg2: i32) -> (i32, i32) {
    %c0_i32 = arith.constant 0 : i32
    %c0_i32_0 = arith.constant 0 : i32
    %c0_i32_1 = arith.constant 0 : i32
    return %c0_i32, %c0_i32_0 : i32, i32
  }
  func.func @transform_4(%arg0: i32, %arg1: i32, %arg2: i32) -> (i32, i32) {
    %c0_i32 = arith.constant 0 : i32
    %c0_i32_0 = arith.constant 0 : i32
    %c0_i32_1 = arith.constant 0 : i32
    return %c0_i32, %c0_i32_0 : i32, i32
  }
  func.func @transform_5(%arg0: i32, %arg1: i32, %arg2: i32) -> (i32, i32) {
    %c0_i32 = arith.constant 0 : i32
    %c0_i32_0 = arith.constant 0 : i32
    %c0_i32_1 = arith.constant 0 : i32
    return %c0_i32, %c0_i32_0 : i32, i32
  }
  func.func @transform_6(%arg0: i32, %arg1: i32, %arg2: i32) -> (i32, i32) {
    %c0_i32 = arith.constant 0 : i32
    %c0_i32_0 = arith.constant 0 : i32
    %c0_i32_1 = arith.constant 0 : i32
    return %c0_i32, %c0_i32_0 : i32, i32
  }
  func.func @transform_7(%arg0: i32, %arg1: i32, %arg2: i32) -> (i32, i32) {
    %c0_i32 = arith.constant 0 : i32
    %c0_i32_0 = arith.constant 0 : i32
    %c0_i32_1 = arith.constant 0 : i32
    return %c0_i32, %c0_i32_0 : i32, i32
  }
  func.func @transform_8(%arg0: i32, %arg1: i32, %arg2: i32) -> (i32, i32, i32) {
    %c0_i32 = arith.constant 0 : i32
    %c0_i32_0 = arith.constant 0 : i32
    return %arg0, %arg1, %c0_i32 : i32, i32, i32
  }
}

</mosaic_0001>

<llo_original>
// kernel: multihead_cross_attention.1
$region0: #{multihead_cross_attention.1}
  #allocation0 [shape = 'u32[]', space=smem, size = 0x4, offset = 0x4, fixed_abs, tag = 'smem constant byte address 0x4 - core index']
  #allocation1 [shape = 'u32[144,128]{1,0:T(1,128)}', space=vmem, size = 0x12000, scoped, tag = 'internal scratch']
  #allocation2 [shape = 'bf16[8,128]{1,0:T(8,128)(2,1)}', space=vmem, size = 0x800, scoped, tag = 'scratch operand']
  #allocation3 [shape = 'f32[4,8,1]{2,1,0:T(8,128)}', space=vmem, size = 0x4000, scoped, tag = 'scratch operand']
  #allocation4 [shape = 'f32[4,8,1]{2,1,0:T(8,128)}', space=vmem, size = 0x4000, scoped, tag = 'scratch operand']
  #allocation5 [shape = 'f32[4,8,8]{2,1,0:T(8,128)}', space=vmem, size = 0x4000, scoped, tag = 'scratch operand']
  %s0 = inlined_call_operand.vmem [shape: f32[2,16,128], index: 0, kind: input, shape index: {}]
  %s1 = inlined_call_operand.vmem [shape: f32[2,16,128], index: 1, kind: input, shape index: {}]
  %s2 = inlined_call_operand.vmem [shape: bf16[128,256], index: 2, kind: input, shape index: {}]
  %s3 = inlined_call_operand.hbm [shape: bf16[128,256], index: 3, kind: input, shape index: {}]
  %s4 = inlined_call_operand.vmem [shape: bf16[32,128], index: 4, kind: input, shape index: {}]
  %s5 = inlined_call_operand.vmem [shape: f32[1,128], index: 5, kind: input, shape index: {}]
  %s6 = inlined_call_operand.vmem [shape: f32[1,128], index: 6, kind: input, shape index: {}]
  %s7 = inlined_call_operand.vmem [shape: f32[1,128], index: 7, kind: input, shape index: {}]
  %s8 = inlined_call_operand.hbm [shape: f32[2,16,128], index: 8, kind: output, shape index: {}]
  %s9 = sld [smem:[#allocation0]]
  $region77: #{multihead_cross_attention.1} parent=0
    _
  %s11 = ssub.s32 1, %s9
  %s12 = scalar_select 0, %s11, %s9
  $region1: #{multihead_cross_attention.1} parent=0
    #allocation6 [shape = 'u8[65536]{0}', space=vmem, size = 0x10000, scoped, tag = 'input window, operand 3, single buffered']
    #allocation7 [shape = 's32[2]{0}', space=sflag, size = 0x8, scoped, tag = 'scoped memory for multihead_cross_attention.1']
    #allocation8 [shape = 's32[2]{0}', space=sflag, size = 0x8, scoped, tag = 'scoped memory for multihead_cross_attention.1']
    #allocation9 [shape = 'u8[8192]{0}', space=vmem, size = 0x2000, scoped, tag = 'output window, operand 0']
    %13 = vsyncpa [#allocation7], 0
    %14 = vsyncpa [#allocation8], 0
    %s15 = scalar_lea.sflag [#allocation8], 1
    %16 = vsyncpa %s15, 0
    loop: start=0, step=1, limit=10
    $region2: #{multihead_cross_attention.1} parent=1 // loop_pre_header
      _
    $region3: #{multihead_cross_attention.1} parent=1 // loop_header
      %s18 = sphi 0, %s22
      %p19 = scmp.ge.s32.totalorder %s18, 10
      %s25 = sphi 0, %s44
      %s26 = sphi 0, %s40
      %s27 = sphi 0, %s36
      %s28 = sphi 0, %s25
      %s29 = sphi 0, %s26
      %s30 = sphi 0, %s27
      %s31 = sphi 0, %s28
      %s32 = sphi 0, %s29
      %s33 = sphi 0, %s30
      %s49 = sphi 0, %s51
      %s52 = sphi 0, %s49
      %s53 = sphi 0, %s52
      %s69 = sphi 0, %s53
      %s77 = sphi 0, %s79
      %s80 = sphi 0, %s77
      %s81 = sphi 0, %s80
      %s97 = sphi 0, %s81
      %s101 = sphi 0, %s101
      %s103 = sphi 0, %s101
      %s104 = sphi 0, %s103
      %s118 = sphi 0, %s104
      %s122 = sphi 0, %s122
      %s124 = sphi 0, %s122
      %s125 = sphi 0, %s124
      %s139 = sphi 0, %s125
      %s143 = sphi 0, %s143
      %s145 = sphi 0, %s143
      %s146 = sphi 0, %s145
      %s160 = sphi 0, %s146
      %s164 = sphi 0, %s164
      %s166 = sphi 0, %s164
      %s167 = sphi 0, %s166
      %s181 = sphi 0, %s167
      %s185 = sphi 0, %s185
      %s187 = sphi 0, %s185
      %s188 = sphi 0, %s187
      %s202 = sphi 0, %s188
      %s206 = sphi 0, %s206
      %s208 = sphi 0, %s206
      %s209 = sphi 0, %s208
      %s223 = sphi 0, %s209
      %s231 = sphi 0, %s233
      %s234 = sphi 0, %s231
      %s235 = sphi 0, %s234
      %s251 = sphi 0, %s235
    $region4: #{multihead_cross_attention.1} parent=1 // loop_header_branch
      %21 = sbr.rel (%p19) target = $region8
    $region5: #{multihead_cross_attention.1} parent=1 // loop_body
      %s23 = ssub.s32 %s18, 1
      %s24 = ssub.s32 %s18, 2
      %s34 = sadd.s32 1, %s27
      %p35 = scmp.ge.s32.totalorder %s34, 2
      %s36 = scalar_select %p35, 0, %s34
      %s37 = sadd.s32 1, %s26
      %s38 = scalar_select %p35, %s37, %s26
      %p39 = scmp.ge.s32.totalorder %s38, 2
      %s40 = scalar_select %p39, 0, %s38
      %s41 = sadd.s32 1, %s25
      %s42 = scalar_select %p39, %s41, %s25
      %p43 = scmp.ge.s32.totalorder %s42, 2
      %s44 = scalar_select %p43, 0, %s42
      %s45 = ssub.s32 %s25, %s44
      %s46 = ssub.s32 %s26, %s40
      %s47 = sor.u32 %s45, %s46
      %p48 = scmp.eq.s32.totalorder %s47, 0
      %s50 = sadd.s32 %s49, 1
      %s51 = scalar_select %p48, %s49, %s50
      %p54 = pneg %p48
      %p55 = scmp.eq.s32.totalorder %s18, 7
      %p56 = por %p54, %p55
      %p57 = scmp.ne.s32.totalorder %s49, %s52
      %p58 = scmp.eq.s32.totalorder %s18, 0
      %p59 = por %p57, %p58
      %p60 = scmp.ne.s32.totalorder %s49, %s52
      %p61 = scmp.eq.s32.totalorder %s23, 7
      %p62 = por %p60, %p61
      %p63 = scmp.ne.s32.totalorder %s52, %s53
      %p64 = scmp.eq.s32.totalorder %s23, 0
      %p65 = por %p63, %p64
      %p66 = scmp.ne.s32.totalorder %s52, %s53
      %p67 = scmp.eq.s32.totalorder %s24, 7
      %p68 = por %p66, %p67
      %p70 = scmp.ne.s32.totalorder %s53, %s69
      %p71 = scmp.eq.s32.totalorder %s24, 0
      %p72 = por %p70, %p71
      %s73 = ssub.s32 %s25, %s44
      %s74 = ssub.s32 %s27, %s36
      %s75 = sor.u32 %s73, %s74
      %p76 = scmp.eq.s32.totalorder %s75, 0
      %s78 = sadd.s32 %s77, 1
      %s79 = scalar_select %p76, %s77, %s78
      %p82 = pneg %p76
      %p83 = scmp.eq.s32.totalorder %s18, 7
      %p84 = por %p82, %p83
      %p85 = scmp.ne.s32.totalorder %s77, %s80
      %p86 = scmp.eq.s32.totalorder %s18, 0
      %p87 = por %p85, %p86
      %p88 = scmp.ne.s32.totalorder %s77, %s80
      %p89 = scmp.eq.s32.totalorder %s23, 7
      %p90 = por %p88, %p89
      %p91 = scmp.ne.s32.totalorder %s80, %s81
      %p92 = scmp.eq.s32.totalorder %s23, 0
      %p93 = por %p91, %p92
      %p94 = scmp.ne.s32.totalorder %s80, %s81
      %p95 = scmp.eq.s32.totalorder %s24, 7
      %p96 = por %p94, %p95
      %p98 = scmp.ne.s32.totalorder %s81, %s97
      %p99 = scmp.eq.s32.totalorder %s24, 0
      %p100 = por %p98, %p99
      %s102 = sadd.s32 %s101, 1
      %p105 = scmp.eq.s32.totalorder %s18, 7
      %p106 = scmp.ne.s32.totalorder %s101, %s103
      %p107 = scmp.eq.s32.totalorder %s18, 0
      %p108 = por %p106, %p107
      %p109 = scmp.ne.s32.totalorder %s101, %s103
      %p110 = scmp.eq.s32.totalorder %s23, 7
      %p111 = por %p109, %p110
      %p112 = scmp.ne.s32.totalorder %s103, %s104
      %p113 = scmp.eq.s32.totalorder %s23, 0
      %p114 = por %p112, %p113
      %p115 = scmp.ne.s32.totalorder %s103, %s104
      %p116 = scmp.eq.s32.totalorder %s24, 7
      %p117 = por %p115, %p116
      %p119 = scmp.ne.s32.totalorder %s104, %s118
      %p120 = scmp.eq.s32.totalorder %s24, 0
      %p121 = por %p119, %p120
      %s123 = sadd.s32 %s122, 1
      %p126 = scmp.eq.s32.totalorder %s18, 7
      %p127 = scmp.ne.s32.totalorder %s122, %s124
      %p128 = scmp.eq.s32.totalorder %s18, 0
      %p129 = por %p127, %p128
      %p130 = scmp.ne.s32.totalorder %s122, %s124
      %p131 = scmp.eq.s32.totalorder %s23, 7
      %p132 = por %p130, %p131
      %p133 = scmp.ne.s32.totalorder %s124, %s125
      %p134 = scmp.eq.s32.totalorder %s23, 0
      %p135 = por %p133, %p134
      %p136 = scmp.ne.s32.totalorder %s124, %s125
      %p137 = scmp.eq.s32.totalorder %s24, 7
      %p138 = por %p136, %p137
      %p140 = scmp.ne.s32.totalorder %s125, %s139
      %p141 = scmp.eq.s32.totalorder %s24, 0
      %p142 = por %p140, %p141
      %s144 = sadd.s32 %s143, 1
      %p147 = scmp.eq.s32.totalorder %s18, 7
      %p148 = scmp.ne.s32.totalorder %s143, %s145
      %p149 = scmp.eq.s32.totalorder %s18, 0
      %p150 = por %p148, %p149
      %p151 = scmp.ne.s32.totalorder %s143, %s145
      %p152 = scmp.eq.s32.totalorder %s23, 7
      %p153 = por %p151, %p152
      %p154 = scmp.ne.s32.totalorder %s145, %s146
      %p155 = scmp.eq.s32.totalorder %s23, 0
      %p156 = por %p154, %p155
      %p157 = scmp.ne.s32.totalorder %s145, %s146
      %p158 = scmp.eq.s32.totalorder %s24, 7
      %p159 = por %p157, %p158
      %p161 = scmp.ne.s32.totalorder %s146, %s160
      %p162 = scmp.eq.s32.totalorder %s24, 0
      %p163 = por %p161, %p162
      %s165 = sadd.s32 %s164, 1
      %p168 = scmp.eq.s32.totalorder %s18, 7
      %p169 = scmp.ne.s32.totalorder %s164, %s166
      %p170 = scmp.eq.s32.totalorder %s18, 0
      %p171 = por %p169, %p170
      %p172 = scmp.ne.s32.totalorder %s164, %s166
      %p173 = scmp.eq.s32.totalorder %s23, 7
      %p174 = por %p172, %p173
      %p175 = scmp.ne.s32.totalorder %s166, %s167
      %p176 = scmp.eq.s32.totalorder %s23, 0
      %p177 = por %p175, %p176
      %p178 = scmp.ne.s32.totalorder %s166, %s167
      %p179 = scmp.eq.s32.totalorder %s24, 7
      %p180 = por %p178, %p179
      %p182 = scmp.ne.s32.totalorder %s167, %s181
      %p183 = scmp.eq.s32.totalorder %s24, 0
      %p184 = por %p182, %p183
      %s186 = sadd.s32 %s185, 1
      %p189 = scmp.eq.s32.totalorder %s18, 7
      %p190 = scmp.ne.s32.totalorder %s185, %s187
      %p191 = scmp.eq.s32.totalorder %s18, 0
      %p192 = por %p190, %p191
      %p193 = scmp.ne.s32.totalorder %s185, %s187
      %p194 = scmp.eq.s32.totalorder %s23, 7
      %p195 = por %p193, %p194
      %p196 = scmp.ne.s32.totalorder %s187, %s188
      %p197 = scmp.eq.s32.totalorder %s23, 0
      %p198 = por %p196, %p197
      %p199 = scmp.ne.s32.totalorder %s187, %s188
      %p200 = scmp.eq.s32.totalorder %s24, 7
      %p201 = por %p199, %p200
      %p203 = scmp.ne.s32.totalorder %s188, %s202
      %p204 = scmp.eq.s32.totalorder %s24, 0
      %p205 = por %p203, %p204
      %s207 = sadd.s32 %s206, 1
      %p210 = scmp.eq.s32.totalorder %s18, 7
      %p211 = scmp.ne.s32.totalorder %s206, %s208
      %p212 = scmp.eq.s32.totalorder %s18, 0
      %p213 = por %p211, %p212
      %p214 = scmp.ne.s32.totalorder %s206, %s208
      %p215 = scmp.eq.s32.totalorder %s23, 7
      %p216 = por %p214, %p215
      %p217 = scmp.ne.s32.totalorder %s208, %s209
      %p218 = scmp.eq.s32.totalorder %s23, 0
      %p219 = por %p217, %p218
      %p220 = scmp.ne.s32.totalorder %s208, %s209
      %p221 = scmp.eq.s32.totalorder %s24, 7
      %p222 = por %p220, %p221
      %p224 = scmp.ne.s32.totalorder %s209, %s223
      %p225 = scmp.eq.s32.totalorder %s24, 0
      %p226 = por %p224, %p225
      %s227 = ssub.s32 %s25, %s44
      %s228 = ssub.s32 %s26, %s40
      %s229 = sor.u32 %s227, %s228
      %p230 = scmp.eq.s32.totalorder %s229, 0
      %s232 = sadd.s32 %s231, 1
      %s233 = scalar_select %p230, %s231, %s232
      %p236 = pneg %p230
      %p237 = scmp.eq.s32.totalorder %s18, 7
      %p238 = por %p236, %p237
      %p239 = scmp.ne.s32.totalorder %s231, %s234
      %p240 = scmp.eq.s32.totalorder %s18, 0
      %p241 = por %p239, %p240
      %p242 = scmp.ne.s32.totalorder %s231, %s234
      %p243 = scmp.eq.s32.totalorder %s23, 7
      %p244 = por %p242, %p243
      %p245 = scmp.ne.s32.totalorder %s234, %s235
      %p246 = scmp.eq.s32.totalorder %s23, 0
      %p247 = por %p245, %p246
      %p248 = scmp.ne.s32.totalorder %s234, %s235
      %p249 = scmp.eq.s32.totalorder %s24, 7
      %p250 = por %p248, %p249
      %p252 = scmp.ne.s32.totalorder %s235, %s251
      %p253 = scmp.eq.s32.totalorder %s24, 0
      %p254 = por %p252, %p253
      %p255 = scmp.le.s32.totalorder 1, %s18
      %p256 = scmp.lt.s32.totalorder %s18, 9
      %p257 = pnand %p255, %p256
      %p258 = pneg %p257
      // Predicated region
      $region9: #{multihead_cross_attention.1} parent=5 // pred_check
        _
      $region10: #{multihead_cross_attention.1} parent=5 // pred_check_branch
        %260 = sbr.rel (%p257) target = $region12
      $region11: #{multihead_cross_attention.1} parent=5 // pred_region
        %s261 = ssub.s32 %s18, 1
        // Predicated region
        $region13: #{multihead_cross_attention.1} parent=11 // pred_check
          %p262 = pneg %p114
        $region14: #{multihead_cross_attention.1} parent=11 // pred_check_branch
          %264 = sbr.rel (%p262) target = $region16
        $region15: #{multihead_cross_attention.1} parent=11 // pred_region
          _
        $region16: #{multihead_cross_attention.1} parent=11 // pred_fallthru
          _
        // Predicated region
        $region17: #{multihead_cross_attention.1} parent=11 // pred_check
          %p265 = pneg %p135
        $region18: #{multihead_cross_attention.1} parent=11 // pred_check_branch
          %267 = sbr.rel (%p265) target = $region20
        $region19: #{multihead_cross_attention.1} parent=11 // pred_region
          %s269 = ssub.s32 2048, 2048
          %270 = vsyncadd [#allocation7], %s269
          %s271 = sshll.u32 [#allocation6], 4
          %s272 = int_to_ptr.vmem [resolvable:$true] %s271
          %277 = dma.hbm_to_vmem [thread:$0]  %s3, 2048, %s272, [#allocation7], 128, 128, 8
        $region20: #{multihead_cross_attention.1} parent=11 // pred_fallthru
          _
        // Predicated region
        $region21: #{multihead_cross_attention.1} parent=11 // pred_check
          %p278 = pneg %p156
        $region22: #{multihead_cross_attention.1} parent=11 // pred_check_branch
          %280 = sbr.rel (%p278) target = $region24
        $region23: #{multihead_cross_attention.1} parent=11 // pred_region
          _
        $region24: #{multihead_cross_attention.1} parent=11 // pred_fallthru
          _
        // Predicated region
        $region25: #{multihead_cross_attention.1} parent=11 // pred_check
          %p281 = pneg %p177
        $region26: #{multihead_cross_attention.1} parent=11 // pred_check_branch
          %283 = sbr.rel (%p281) target = $region28
        $region27: #{multihead_cross_attention.1} parent=11 // pred_region
          _
        $region28: #{multihead_cross_attention.1} parent=11 // pred_fallthru
          _
        // Predicated region
        $region29: #{multihead_cross_attention.1} parent=11 // pred_check
          %p284 = pneg %p198
        $region30: #{multihead_cross_attention.1} parent=11 // pred_check_branch
          %286 = sbr.rel (%p284) target = $region32
        $region31: #{multihead_cross_attention.1} parent=11 // pred_region
          _
        $region32: #{multihead_cross_attention.1} parent=11 // pred_fallthru
          _
        // Predicated region
        $region33: #{multihead_cross_attention.1} parent=11 // pred_check
          %p287 = pneg %p219
        $region34: #{multihead_cross_attention.1} parent=11 // pred_check_branch
          %289 = sbr.rel (%p287) target = $region36
        $region35: #{multihead_cross_attention.1} parent=11 // pred_region
          _
        $region36: #{multihead_cross_attention.1} parent=11 // pred_fallthru
          _
      $region12: #{multihead_cross_attention.1} parent=5 // pred_fallthru
        _
      %p290 = scmp.lt.s32.totalorder %s18, 8
      // Predicated region
      $region37: #{multihead_cross_attention.1} parent=5 // pred_check
        %p291 = pneg %p290
      $region38: #{multihead_cross_attention.1} parent=5 // pred_check_branch
        %293 = sbr.rel (%p291) target = $region40
      $region39: #{multihead_cross_attention.1} parent=5 // pred_region
        // Predicated region
        $region41: #{multihead_cross_attention.1} parent=39 // pred_check
          %p294 = pneg %p59
        $region42: #{multihead_cross_attention.1} parent=39 // pred_check_branch
          %296 = sbr.rel (%p294) target = $region44
        $region43: #{multihead_cross_attention.1} parent=39 // pred_region
          %p297 = scmp.lt.s32.totalorder %s25, 1
          %s298 = scalar_select %p297, %s25, 1
          %p299 = scmp.lt.s32.totalorder %s26, 1
          %s300 = scalar_select %p299, %s26, 1
          %s301 = smul.addr %s298, 2
          %s302 = sadd.s32 %s300, %s301
          %s303 = smul.addr %s302, 8
          %s304 = scalar_lea.vmem %s0, %s303
        $region44: #{multihead_cross_attention.1} parent=39 // pred_fallthru
          _
        // Predicated region
        $region45: #{multihead_cross_attention.1} parent=39 // pred_check
          %p305 = pneg %p87
        $region46: #{multihead_cross_attention.1} parent=39 // pred_check_branch
          %307 = sbr.rel (%p305) target = $region48
        $region47: #{multihead_cross_attention.1} parent=39 // pred_region
          %p308 = scmp.lt.s32.totalorder %s25, 1
          %s309 = scalar_select %p308, %s25, 1
          %p310 = scmp.lt.s32.totalorder %s27, 1
          %s311 = scalar_select %p310, %s27, 1
          %s312 = smul.addr %s309, 2
          %s313 = sadd.s32 %s311, %s312
          %s314 = smul.addr %s313, 8
          %s315 = scalar_lea.vmem %s1, %s314
        $region48: #{multihead_cross_attention.1} parent=39 // pred_fallthru
          _
      $region40: #{multihead_cross_attention.1} parent=5 // pred_fallthru
        _
      %p316 = scmp.le.s32.totalorder 1, %s18
      %p317 = scmp.lt.s32.totalorder %s18, 9
      %p318 = pnand %p316, %p317
      %p319 = pneg %p318
      // Predicated region
      $region49: #{multihead_cross_attention.1} parent=5 // pred_check
        _
      $region50: #{multihead_cross_attention.1} parent=5 // pred_check_branch
        %321 = sbr.rel (%p318) target = $region52
      $region51: #{multihead_cross_attention.1} parent=5 // pred_region
        %s322 = ssub.s32 %s18, 1
        // Predicated region
        $region53: #{multihead_cross_attention.1} parent=51 // pred_check
          %p323 = pneg %p135
        $region54: #{multihead_cross_attention.1} parent=51 // pred_check_branch
          %325 = sbr.rel (%p323) target = $region56
        $region55: #{multihead_cross_attention.1} parent=51 // pred_region
          %326 = dma.done [#allocation7], 2048
        $region56: #{multihead_cross_attention.1} parent=51 // pred_fallthru
          _
        %p327 = scmp.lt.s32.totalorder %s28, 1
        %s328 = scalar_select %p327, %s28, 1
        %p329 = scmp.lt.s32.totalorder %s29, 1
        %s330 = scalar_select %p329, %s29, 1
        %s331 = smul.addr %s328, 2
        %s332 = sadd.s32 %s330, %s331
        %s333 = smul.addr %s332, 8
        %s334 = scalar_lea.vmem %s0, %s333
        %p335 = pneg %p65
        %p336 = pneg %p62
        %p337 = scmp.lt.s32.totalorder %s28, 1
        %s338 = scalar_select %p337, %s28, 1
        %p339 = scmp.lt.s32.totalorder %s30, 1
        %s340 = scalar_select %p339, %s30, 1
        %s341 = smul.addr %s338, 2
        %s342 = sadd.s32 %s340, %s341
        %s343 = smul.addr %s342, 8
        %s344 = scalar_lea.vmem %s1, %s343
        %p345 = pneg %p93
        %p346 = pneg %p90
        %p347 = pneg %p114
        %p348 = pneg %p111
        %p349 = pneg %p135
        %p350 = pneg %p132
        %p351 = pneg %p156
        %p352 = pneg %p153
        %p353 = pneg %p177
        %p354 = pneg %p174
        %p355 = pneg %p198
        %p356 = pneg %p195
        %p357 = pneg %p219
        %p358 = pneg %p216
        %p359 = pneg %p247
        %p360 = pneg %p244
        %s361 = sand.u32 %s234, 1
        %s362 = scalar_lea.sflag [#allocation8], %s361
        %s363 = sand.u32 %s234, 1
        %s364 = smul.addr %s363, 8
        %s365 = scalar_lea.vmem [#allocation9], %s364
        %p366 = scmp.lt.s32.totalorder %s28, 1
        %s367 = scalar_select %p366, %s28, 1
        %p368 = scmp.lt.s32.totalorder %s29, 1
        %s369 = scalar_select %p368, %s29, 1
        %s370 = smul.addr %s367, 2
        %s371 = sadd.s32 %s369, %s370
        %s372 = smul.addr %s371, 8
        %s373 = scalar_lea.vmem %s0, %s372
        %p374 = scmp.lt.s32.totalorder %s28, 1
        %s375 = scalar_select %p374, %s28, 1
        %p376 = scmp.lt.s32.totalorder %s30, 1
        %s377 = scalar_select %p376, %s30, 1
        %s378 = smul.addr %s375, 2
        %s379 = sadd.s32 %s377, %s378
        %s380 = smul.addr %s379, 8
        %s381 = scalar_lea.vmem %s1, %s380
        %p383 = scmp.eq.s32.totalorder %s30, 0
        // Predicated region
        $region57: #{multihead_cross_attention.1} parent=51 // pred_check
          %p384 = pneg %p383
        $region58: #{multihead_cross_attention.1} parent=51 // pred_check_branch
          %386 = sbr.rel (%p384) target = $region60
        $region59: #{multihead_cross_attention.1} parent=51 // pred_region
          %v387 = vld [vmem:[%s373] sm:$0xff]
          %v388 = vpack.c.bf16 %v387, %v387
          %v389 = vld [vmem:[%s2] sm:$0xff]
          %v390 = vld [vmem:[%s2 + $0x8] sm:$0xff]
          %v391 = vld [vmem:[%s2 + $0x10] sm:$0xff]
          %v392 = vld [vmem:[%s2 + $0x18] sm:$0xff]
          %v393 = vld [vmem:[%s2 + $0x20] sm:$0xff]
          %v394 = vld [vmem:[%s2 + $0x28] sm:$0xff]
          %v395 = vld [vmem:[%s2 + $0x30] sm:$0xff]
          %v396 = vld [vmem:[%s2 + $0x38] sm:$0xff]
          %v397 = vld [vmem:[%s2 + $0x40] sm:$0xff]
          %v398 = vld [vmem:[%s2 + $0x48] sm:$0xff]
          %v399 = vld [vmem:[%s2 + $0x50] sm:$0xff]
          %v400 = vld [vmem:[%s2 + $0x58] sm:$0xff]
          %v401 = vld [vmem:[%s2 + $0x60] sm:$0xff]
          %v402 = vld [vmem:[%s2 + $0x68] sm:$0xff]
          %v403 = vld [vmem:[%s2 + $0x70] sm:$0xff]
          %v404 = vld [vmem:[%s2 + $0x78] sm:$0xff]
          %v421 = vunpack.c.l.b16 %v389
          %v422 = vunpack.c.h.b16 %v389
          %v423 = vunpack.c.l.b16 %v390
          %v424 = vunpack.c.h.b16 %v390
          %v425 = vunpack.c.l.b16 %v391
          %v426 = vunpack.c.h.b16 %v391
          %v427 = vunpack.c.l.b16 %v392
          %v428 = vunpack.c.h.b16 %v392
          %v429 = vunpack.c.l.b16 %v393
          %v430 = vunpack.c.h.b16 %v393
          %v431 = vunpack.c.l.b16 %v394
          %v432 = vunpack.c.h.b16 %v394
          %v433 = vunpack.c.l.b16 %v395
          %v434 = vunpack.c.h.b16 %v395
          %v435 = vunpack.c.l.b16 %v396
          %v436 = vunpack.c.h.b16 %v396
          %v437 = vunpack.c.l.b16 %v397
          %v438 = vunpack.c.h.b16 %v397
          %v439 = vunpack.c.l.b16 %v398
          %v440 = vunpack.c.h.b16 %v398
          %v441 = vunpack.c.l.b16 %v399
          %v442 = vunpack.c.h.b16 %v399
          %v443 = vunpack.c.l.b16 %v400
          %v444 = vunpack.c.h.b16 %v400
          %v445 = vunpack.c.l.b16 %v401
          %v446 = vunpack.c.h.b16 %v401
          %v447 = vunpack.c.l.b16 %v402
          %v448 = vunpack.c.h.b16 %v402
          %v449 = vunpack.c.l.b16 %v403
          %v450 = vunpack.c.h.b16 %v403
          %v451 = vunpack.c.l.b16 %v404
          %v452 = vunpack.c.h.b16 %v404
          %v453 = vpack.c.b16 %v423, %v421
          %v454 = vpack.c.b16 %v424, %v422
          %v455 = vpack.c.b16 %v427, %v425
          %v456 = vpack.c.b16 %v428, %v426
          %v457 = vpack.c.b16 %v431, %v429
          %v458 = vpack.c.b16 %v432, %v430
          %v459 = vpack.c.b16 %v435, %v433
          %v460 = vpack.c.b16 %v436, %v434
          %v461 = vpack.c.b16 %v439, %v437
          %v462 = vpack.c.b16 %v440, %v438
          %v463 = vpack.c.b16 %v443, %v441
          %v464 = vpack.c.b16 %v444, %v442
          %v465 = vpack.c.b16 %v447, %v445
          %v466 = vpack.c.b16 %v448, %v446
          %v467 = vpack.c.b16 %v451, %v449
          %v468 = vpack.c.b16 %v452, %v450
          %485 = vmatprep.subr.bf16.mxu0 %v454
          %486 = vmatpush1.bf16.msra.mxu0 %v453
          %487 = vmatprep.subr.bf16.mxu0 %v456
          %488 = vmatpush1.bf16.msra.mxu0 %v455
          %489 = vmatprep.subr.bf16.mxu0 %v458
          %490 = vmatpush1.bf16.msra.mxu0 %v457
          %491 = vmatprep.subr.bf16.mxu0 %v460
          %492 = vmatpush1.bf16.msra.mxu0 %v459
          %493 = vmatprep.subr.bf16.mxu0 %v462
          %494 = vmatpush1.bf16.msra.mxu0 %v461
          %495 = vmatprep.subr.bf16.mxu0 %v464
          %496 = vmatpush1.bf16.msra.mxu0 %v463
          %497 = vmatprep.subr.bf16.mxu0 %v466
          %498 = vmatpush1.bf16.msra.mxu0 %v465
          %499 = vmatprep.subr.bf16.mxu0 %v468
          %500 = vmatpush1.bf16.msra.mxu0 %v467
          %501 = vmatprep.subr.bf16.mxu0 0
          %502 = vmatpush1.bf16.msra.mxu0 0
          %503 = vmatprep.subr.bf16.mxu0 0
          %504 = vmatpush1.bf16.msra.mxu0 0
          %505 = vmatprep.subr.bf16.mxu0 0
          %506 = vmatpush1.bf16.msra.mxu0 0
          %507 = vmatprep.subr.bf16.mxu0 0
          %508 = vmatpush1.bf16.msra.mxu0 0
          %509 = vmatprep.subr.bf16.mxu0 0
          %510 = vmatpush1.bf16.msra.mxu0 0
          %511 = vmatprep.subr.bf16.mxu0 0
          %512 = vmatpush1.bf16.msra.mxu0 0
          %513 = vmatprep.subr.bf16.mxu0 0
          %514 = vmatpush1.bf16.msra.mxu0 0
          %515 = vmatprep.subr.bf16.mxu0 0
          %516 = vmatpush1.bf16.msra.mxu0 0
          %517 = vmatprep.mubr.bf16.mxu0 0
          %518 = vmatmul.mubr.bf16.gmra.mrb[0].mxu0 %v388
          %v519 = vpop.f32.mrb[0].mxu0
          %v520 = vadd.f32 0.0, %v519
          %v521 = vpop.f32.mrb[0].mxu0
          %v522 = vadd.f32 0.0, %v521
          %v523 = vpop.f32.mrb[0].mxu0
          %v524 = vpop.f32.mrb[0].mxu0
          %525 = vdwg.mxu0
          %v526 = vld [vmem:[%s5] sm:$0x1]
          %v528 = vlaneseq
          %v529 = vshrl.u32 %v528, 7
          %v530 = vsub.s32 0, %v529
          %v531 = vrot.slane %v526, %v530
          %v533 = vadd.f32 %v520, %v531
          %v534 = vpack.c.bf16 %v533, %v533
          %535 = vst [vmem:[#allocation2] sm:$0xf] %v534
          %v536 = vld [vmem:[%s7] sm:$0x1]
          %v538 = vlaneseq
          %v539 = vshrl.u32 %v538, 7
          %v540 = vsub.s32 0, %v539
          %v541 = vrot.slane %v536, %v540
          %v543 = vadd.f32 %v522, %v541
          %544 = vst [vmem:[%s365] sm:$0xff] %v543
          %vm545 = vcmask 7168
          %546 = vst.msk [vmem:[#allocation3] sm:$0xff] %vm545, -inf
          %547 = vst.msk [vmem:[#allocation3 + $0x8] sm:$0xff] %vm545, -inf
          %548 = vst.msk [vmem:[#allocation3 + $0x10] sm:$0xff] %vm545, -inf
          %549 = vst.msk [vmem:[#allocation3 + $0x18] sm:$0xff] %vm545, -inf
          %550 = vst.msk [vmem:[#allocation4] sm:$0xff] %vm545, 0.0
          %551 = vst.msk [vmem:[#allocation4 + $0x8] sm:$0xff] %vm545, 0.0
          %552 = vst.msk [vmem:[#allocation4 + $0x10] sm:$0xff] %vm545, 0.0
          %553 = vst.msk [vmem:[#allocation4 + $0x18] sm:$0xff] %vm545, 0.0
          %vm554 = vcmask 64512
          %555 = vst.msk [vmem:[#allocation5] sm:$0xff] %vm554, 0.0
          %556 = vst.msk [vmem:[#allocation5 + $0x8] sm:$0xff] %vm554, 0.0
          %557 = vst.msk [vmem:[#allocation5 + $0x10] sm:$0xff] %vm554, 0.0
          %558 = vst.msk [vmem:[#allocation5 + $0x18] sm:$0xff] %vm554, 0.0
        $region60: #{multihead_cross_attention.1} parent=51 // pred_fallthru
          _
        %v559 = vld [vmem:[%s381] sm:$0xff]
        %v560 = vpack.c.bf16 %v559, %v559
        %v561 = vld [vmem:[#allocation6] sm:$0xff]
        %v562 = vld [vmem:[#allocation6 + $0x8] sm:$0xff]
        %v563 = vld [vmem:[#allocation6 + $0x10] sm:$0xff]
        %v564 = vld [vmem:[#allocation6 + $0x18] sm:$0xff]
        %v565 = vld [vmem:[#allocation6 + $0x20] sm:$0xff]
        %v566 = vld [vmem:[#allocation6 + $0x28] sm:$0xff]
        %v567 = vld [vmem:[#allocation6 + $0x30] sm:$0xff]
        %v568 = vld [vmem:[#allocation6 + $0x38] sm:$0xff]
        %v569 = vld [vmem:[#allocation6 + $0x40] sm:$0xff]
        %v570 = vld [vmem:[#allocation6 + $0x48] sm:$0xff]
        %v571 = vld [vmem:[#allocation6 + $0x50] sm:$0xff]
        %v572 = vld [vmem:[#allocation6 + $0x58] sm:$0xff]
        %v573 = vld [vmem:[#allocation6 + $0x60] sm:$0xff]
        %v574 = vld [vmem:[#allocation6 + $0x68] sm:$0xff]
        %v575 = vld [vmem:[#allocation6 + $0x70] sm:$0xff]
        %v576 = vld [vmem:[#allocation6 + $0x78] sm:$0xff]
        %v593 = vunpack.c.l.b16 %v561
        %v594 = vunpack.c.h.b16 %v561
        %v595 = vunpack.c.l.b16 %v562
        %v596 = vunpack.c.h.b16 %v562
        %v597 = vunpack.c.l.b16 %v563
        %v598 = vunpack.c.h.b16 %v563
        %v599 = vunpack.c.l.b16 %v564
        %v600 = vunpack.c.h.b16 %v564
        %v601 = vunpack.c.l.b16 %v565
        %v602 = vunpack.c.h.b16 %v565
        %v603 = vunpack.c.l.b16 %v566
        %v604 = vunpack.c.h.b16 %v566
        %v605 = vunpack.c.l.b16 %v567
        %v606 = vunpack.c.h.b16 %v567
        %v607 = vunpack.c.l.b16 %v568
        %v608 = vunpack.c.h.b16 %v568
        %v609 = vunpack.c.l.b16 %v569
        %v610 = vunpack.c.h.b16 %v569
        %v611 = vunpack.c.l.b16 %v570
        %v612 = vunpack.c.h.b16 %v570
        %v613 = vunpack.c.l.b16 %v571
        %v614 = vunpack.c.h.b16 %v571
        %v615 = vunpack.c.l.b16 %v572
        %v616 = vunpack.c.h.b16 %v572
        %v617 = vunpack.c.l.b16 %v573
        %v618 = vunpack.c.h.b16 %v573
        %v619 = vunpack.c.l.b16 %v574
        %v620 = vunpack.c.h.b16 %v574
        %v621 = vunpack.c.l.b16 %v575
        %v622 = vunpack.c.h.b16 %v575
        %v623 = vunpack.c.l.b16 %v576
        %v624 = vunpack.c.h.b16 %v576
        %v625 = vpack.c.b16 %v595, %v593
        %v626 = vpack.c.b16 %v596, %v594
        %v627 = vpack.c.b16 %v599, %v597
        %v628 = vpack.c.b16 %v600, %v598
        %v629 = vpack.c.b16 %v603, %v601
        %v630 = vpack.c.b16 %v604, %v602
        %v631 = vpack.c.b16 %v607, %v605
        %v632 = vpack.c.b16 %v608, %v606
        %v633 = vpack.c.b16 %v611, %v609
        %v634 = vpack.c.b16 %v612, %v610
        %v635 = vpack.c.b16 %v615, %v613
        %v636 = vpack.c.b16 %v616, %v614
        %v637 = vpack.c.b16 %v619, %v617
        %v638 = vpack.c.b16 %v620, %v618
        %v639 = vpack.c.b16 %v623, %v621
        %v640 = vpack.c.b16 %v624, %v622
        %657 = vmatprep.subr.bf16.mxu0 %v626
        %658 = vmatpush1.bf16.msra.mxu0 %v625
        %659 = vmatprep.subr.bf16.mxu0 %v628
        %660 = vmatpush1.bf16.msra.mxu0 %v627
        %661 = vmatprep.subr.bf16.mxu0 %v630
        %662 = vmatpush1.bf16.msra.mxu0 %v629
        %663 = vmatprep.subr.bf16.mxu0 %v632
        %664 = vmatpush1.bf16.msra.mxu0 %v631
        %665 = vmatprep.subr.bf16.mxu0 %v634
        %666 = vmatpush1.bf16.msra.mxu0 %v633
        %667 = vmatprep.subr.bf16.mxu0 %v636
        %668 = vmatpush1.bf16.msra.mxu0 %v635
        %669 = vmatprep.subr.bf16.mxu0 %v638
        %670 = vmatpush1.bf16.msra.mxu0 %v637
        %671 = vmatprep.subr.bf16.mxu0 %v640
        %672 = vmatpush1.bf16.msra.mxu0 %v639
        %673 = vmatprep.subr.bf16.mxu0 0
        %674 = vmatpush1.bf16.msra.mxu0 0
        %675 = vmatprep.subr.bf16.mxu0 0
        %676 = vmatpush1.bf16.msra.mxu0 0
        %677 = vmatprep.subr.bf16.mxu0 0
        %678 = vmatpush1.bf16.msra.mxu0 0
        %679 = vmatprep.subr.bf16.mxu0 0
        %680 = vmatpush1.bf16.msra.mxu0 0
        %681 = vmatprep.subr.bf16.mxu0 0
        %682 = vmatpush1.bf16.msra.mxu0 0
        %683 = vmatprep.subr.bf16.mxu0 0
        %684 = vmatpush1.bf16.msra.mxu0 0
        %685 = vmatprep.subr.bf16.mxu0 0
        %686 = vmatpush1.bf16.msra.mxu0 0
        %687 = vmatprep.subr.bf16.mxu0 0
        %688 = vmatpush1.bf16.msra.mxu0 0
        %689 = vmatprep.mubr.bf16.mxu0 0
        %690 = vmatmul.mubr.bf16.gmra.mrb[0].mxu0 %v560
        %v691 = vpop.f32.mrb[0].mxu0
        %v692 = vadd.f32 0.0, %v691
        %v693 = vpop.f32.mrb[0].mxu0
        %v694 = vadd.f32 0.0, %v693
        %v695 = vpop.f32.mrb[0].mxu0
        %v696 = vpop.f32.mrb[0].mxu0
        %697 = vdwg.mxu0
        %v698 = vpack.c.bf16 %v692, %v692
        %v699 = vld [vmem:[%s6] sm:$0x1]
        %v701 = vlaneseq
        %v702 = vshrl.u32 %v701, 7
        %v703 = vsub.s32 0, %v702
        %v704 = vrot.slane %v699, %v703
        %v706 = vadd.f32 %v694, %v704
        %v707 = vpack.c.bf16 %v706, %v706
        %v708 = vld [vmem:[#allocation2] sm:$0xf]
        %s709 = smul.u32 %s30, 8
        %v710 = vlaneseq
        %v711 = vand.u32 %v710, 127
        %v712 = vstv %s709
        %v713 = vadd.s32 %v712, %v711
        %vm714 = vcmp.lt.s32.totalorder %v713, 12
        %vm715 = vcmask 64512
        %v717 = vsel %vm715, %v708, 0
        %v720 = vsel %vm715, %v698, 0
        %722 = vmatprep.subr.bf16.mxu0 0
        %723 = vmatpush1.bf16.xpose.msra.mxu0 %v720
        %724 = vmatprep.subr.bf16.mxu0 0
        %725 = vmatpush1.bf16.xpose.msra.mxu0 0
        %726 = vmatprep.subr.bf16.mxu0 0
        %727 = vmatpush1.bf16.xpose.msra.mxu0 0
        %728 = vmatprep.subr.bf16.mxu0 0
        %729 = vmatpush1.bf16.xpose.msra.mxu0 0
        %730 = vmatprep.subr.bf16.mxu0 0
        %731 = vmatpush1.bf16.xpose.msra.mxu0 0
        %732 = vmatprep.subr.bf16.mxu0 0
        %733 = vmatpush1.bf16.xpose.msra.mxu0 0
        %734 = vmatprep.subr.bf16.mxu0 0
        %735 = vmatpush1.bf16.xpose.msra.mxu0 0
        %736 = vmatprep.subr.bf16.mxu0 0
        %737 = vmatpush1.bf16.xpose.msra.mxu0 0
        %738 = vmatprep.subr.bf16.mxu0 0
        %739 = vmatpush1.bf16.xpose.msra.mxu0 0
        %740 = vmatprep.subr.bf16.mxu0 0
        %741 = vmatpush1.bf16.xpose.msra.mxu0 0
        %742 = vmatprep.subr.bf16.mxu0 0
        %743 = vmatpush1.bf16.xpose.msra.mxu0 0
        %744 = vmatprep.subr.bf16.mxu0 0
        %745 = vmatpush1.bf16.xpose.msra.mxu0 0
        %746 = vmatprep.subr.bf16.mxu0 0
        %747 = vmatpush1.bf16.xpose.msra.mxu0 0
        %748 = vmatprep.subr.bf16.mxu0 0
        %749 = vmatpush1.bf16.xpose.msra.mxu0 0
        %750 = vmatprep.subr.bf16.mxu0 0
        %751 = vmatpush1.bf16.xpose.msra.mxu0 0
        %752 = vmatprep.subr.bf16.mxu0 0
        %753 = vmatpush1.bf16.xpose.msra.mxu0 0
        %754 = vmatprep.mubr.bf16.mxu0 0
        %755 = vmatmul.mubr.bf16.gmra.mrb[0].mxu0 %v717
        %v756 = vpop.f32.mrb[0].mxu0
        %v757 = vadd.f32 0.0, %v756
        %v758 = vpop.f32.mrb[0].mxu0
        %v759 = vpop.f32.mrb[0].mxu0
        %v760 = vpop.f32.mrb[0].mxu0
        %761 = vdwg.mxu0
        %v762 = vsel %vm714, %v757, -inf
        %v763 = vld [vmem:[#allocation3] sm:$0xff]
        %v764 = vsel %vm715, %v762, -inf
        %765 = vmax.xlane.f32.xlu0 %v764
        %v766 = vpop.xlane.xlu0 %765
        %v767 = vmax.f32 %v763, %v766
        %v768 = vsub.f32 %v763, %v767
        %v769 = vmul.f32 %v768, 1.442695
        %v770 = vpow.pop %v769
        %772 = vset.pattern.permute.xlu0 0
        %773 = vperm.xlu0 %772, %v767
        %v774 = vpop.permute.xlu0 %773
        %v776 = vsub.f32 %v762, %v774
        %v777 = vmul.f32 %v776, 1.442695
        %v778 = vpow.pop %v777
        %v779 = vld [vmem:[#allocation4] sm:$0xff]
        %v780 = vmul.f32 %v770, %v779
        %v781 = vsel %vm715, %v778, 0.0
        %782 = vadd.xlane.f32.xlu0 %v781
        %v783 = vpop.xlane.xlu0 %782
        %v784 = vadd.f32 %v780, %v783
        %vm785 = vcmask 7168
        %786 = vst.msk [vmem:[#allocation4] sm:$0xff] %vm785, %v784
        %v787 = vld [vmem:[#allocation5] sm:$0xff]
        %789 = vset.pattern.permute.xlu0 0
        %790 = vperm.xlu0 %789, %v770
        %v791 = vpop.permute.xlu0 %790
        %v793 = vmul.f32 %v791, %v787
        %v794 = vpack.c.bf16 %v778, %v778
        %v796 = vsel %vm715, %v794, 0
        %vm798 = vcmask 1043456
        %v800 = vsel %vm798, %v707, 0
        %802 = vmatprep.subr.bf16.mxu0 0
        %803 = vmatpush1.bf16.msra.mxu0 %v800
        %804 = vmatprep.subr.bf16.mxu0 0
        %805 = vmatpush1.bf16.msra.mxu0 0
        %806 = vmatprep.subr.bf16.mxu0 0
        %807 = vmatpush1.bf16.msra.mxu0 0
        %808 = vmatprep.subr.bf16.mxu0 0
        %809 = vmatpush1.bf16.msra.mxu0 0
        %810 = vmatprep.subr.bf16.mxu0 0
        %811 = vmatpush1.bf16.msra.mxu0 0
        %812 = vmatprep.subr.bf16.mxu0 0
        %813 = vmatpush1.bf16.msra.mxu0 0
        %814 = vmatprep.subr.bf16.mxu0 0
        %815 = vmatpush1.bf16.msra.mxu0 0
        %816 = vmatprep.subr.bf16.mxu0 0
        %817 = vmatpush1.bf16.msra.mxu0 0
        %818 = vmatprep.subr.bf16.mxu0 0
        %819 = vmatpush1.bf16.msra.mxu0 0
        %820 = vmatprep.subr.bf16.mxu0 0
        %821 = vmatpush1.bf16.msra.mxu0 0
        %822 = vmatprep.subr.bf16.mxu0 0
        %823 = vmatpush1.bf16.msra.mxu0 0
        %824 = vmatprep.subr.bf16.mxu0 0
        %825 = vmatpush1.bf16.msra.mxu0 0
        %826 = vmatprep.subr.bf16.mxu0 0
        %827 = vmatpush1.bf16.msra.mxu0 0
        %828 = vmatprep.subr.bf16.mxu0 0
        %829 = vmatpush1.bf16.msra.mxu0 0
        %830 = vmatprep.subr.bf16.mxu0 0
        %831 = vmatpush1.bf16.msra.mxu0 0
        %832 = vmatprep.subr.bf16.mxu0 0
        %833 = vmatpush1.bf16.msra.mxu0 0
        %834 = vmatprep.mubr.bf16.mxu0 0
        %835 = vmatmul.mubr.bf16.gmra.mrb[0].mxu0 %v796
        %v836 = vpop.f32.mrb[0].mxu0
        %v837 = vadd.f32 0.0, %v836
        %v838 = vpop.f32.mrb[0].mxu0
        %v839 = vpop.f32.mrb[0].mxu0
        %v840 = vpop.f32.mrb[0].mxu0
        %841 = vdwg.mxu0
        %v842 = vadd.f32 %v793, %v837
        %843 = vst.msk [vmem:[#allocation5] sm:$0xff] %vm715, %v842
        %844 = vst.msk [vmem:[#allocation3] sm:$0xff] %vm785, %v767
        %v846 = vunpack.c.l.b16 %v708
        %v847 = vpack.c.b16 %v846, %v846
        %848 = vrot.lane.b32.xlu0 %v847, 120
        %v849 = vpop.permute.xlu0 %848
        %851 = vrot.lane.b32.xlu0 %v698, 120
        %v852 = vpop.permute.xlu0 %851
        %v854 = vsel %vm715, %v849, 0
        %v857 = vsel %vm715, %v852, 0
        %859 = vmatprep.subr.bf16.mxu0 0
        %860 = vmatpush1.bf16.xpose.msra.mxu0 %v857
        %861 = vmatprep.subr.bf16.mxu0 0
        %862 = vmatpush1.bf16.xpose.msra.mxu0 0
        %863 = vmatprep.subr.bf16.mxu0 0
        %864 = vmatpush1.bf16.xpose.msra.mxu0 0
        %865 = vmatprep.subr.bf16.mxu0 0
        %866 = vmatpush1.bf16.xpose.msra.mxu0 0
        %867 = vmatprep.subr.bf16.mxu0 0
        %868 = vmatpush1.bf16.xpose.msra.mxu0 0
        %869 = vmatprep.subr.bf16.mxu0 0
        %870 = vmatpush1.bf16.xpose.msra.mxu0 0
        %871 = vmatprep.subr.bf16.mxu0 0
        %872 = vmatpush1.bf16.xpose.msra.mxu0 0
        %873 = vmatprep.subr.bf16.mxu0 0
        %874 = vmatpush1.bf16.xpose.msra.mxu0 0
        %875 = vmatprep.subr.bf16.mxu0 0
        %876 = vmatpush1.bf16.xpose.msra.mxu0 0
        %877 = vmatprep.subr.bf16.mxu0 0
        %878 = vmatpush1.bf16.xpose.msra.mxu0 0
        %879 = vmatprep.subr.bf16.mxu0 0
        %880 = vmatpush1.bf16.xpose.msra.mxu0 0
        %881 = vmatprep.subr.bf16.mxu0 0
        %882 = vmatpush1.bf16.xpose.msra.mxu0 0
        %883 = vmatprep.subr.bf16.mxu0 0
        %884 = vmatpush1.bf16.xpose.msra.mxu0 0
        %885 = vmatprep.subr.bf16.mxu0 0
        %886 = vmatpush1.bf16.xpose.msra.mxu0 0
        %887 = vmatprep.subr.bf16.mxu0 0
        %888 = vmatpush1.bf16.xpose.msra.mxu0 0
        %889 = vmatprep.subr.bf16.mxu0 0
        %890 = vmatpush1.bf16.xpose.msra.mxu0 0
        %891 = vmatprep.mubr.bf16.mxu0 0
        %892 = vmatmul.mubr.bf16.gmra.mrb[0].mxu0 %v854
        %v893 = vpop.f32.mrb[0].mxu0
        %v894 = vadd.f32 0.0, %v893
        %v895 = vpop.f32.mrb[0].mxu0
        %v896 = vpop.f32.mrb[0].mxu0
        %v897 = vpop.f32.mrb[0].mxu0
        %898 = vdwg.mxu0
        %v899 = vsel %vm714, %v894, -inf
        %s900 = scalar_lea.vmem [#allocation3], 8
        %v901 = vld [vmem:[%s900] sm:$0xff]
        %v902 = vsel %vm715, %v899, -inf
        %903 = vmax.xlane.f32.xlu0 %v902
        %v904 = vpop.xlane.xlu0 %903
        %v905 = vmax.f32 %v901, %v904
        %v906 = vsub.f32 %v901, %v905
        %v907 = vmul.f32 %v906, 1.442695
        %v908 = vpow.pop %v907
        %910 = vset.pattern.permute.xlu0 0
        %911 = vperm.xlu0 %910, %v905
        %v912 = vpop.permute.xlu0 %911
        %v914 = vsub.f32 %v899, %v912
        %v915 = vmul.f32 %v914, 1.442695
        %v916 = vpow.pop %v915
        %s917 = scalar_lea.vmem [#allocation4], 8
        %v918 = vld [vmem:[%s917] sm:$0xff]
        %v919 = vmul.f32 %v908, %v918
        %v920 = vsel %vm715, %v916, 0.0
        %921 = vadd.xlane.f32.xlu0 %v920
        %v922 = vpop.xlane.xlu0 %921
        %v923 = vadd.f32 %v919, %v922
        %924 = vst.msk [vmem:[%s917] sm:$0xff] %vm785, %v923
        %s925 = scalar_lea.vmem [#allocation5], 8
        %v926 = vld [vmem:[%s925] sm:$0xff]
        %928 = vset.pattern.permute.xlu0 0
        %929 = vperm.xlu0 %928, %v908
        %v930 = vpop.permute.xlu0 %929
        %v932 = vmul.f32 %v930, %v926
        %v933 = vpack.c.bf16 %v916, %v916
        %935 = vrot.lane.b32.xlu0 %v707, 120
        %v936 = vpop.permute.xlu0 %935
        %v938 = vsel %vm715, %v933, 0
        %v941 = vsel %vm798, %v936, 0
        %943 = vmatprep.subr.bf16.mxu0 0
        %944 = vmatpush1.bf16.msra.mxu0 %v941
        %945 = vmatprep.subr.bf16.mxu0 0
        %946 = vmatpush1.bf16.msra.mxu0 0
        %947 = vmatprep.subr.bf16.mxu0 0
        %948 = vmatpush1.bf16.msra.mxu0 0
        %949 = vmatprep.subr.bf16.mxu0 0
        %950 = vmatpush1.bf16.msra.mxu0 0
        %951 = vmatprep.subr.bf16.mxu0 0
        %952 = vmatpush1.bf16.msra.mxu0 0
        %953 = vmatprep.subr.bf16.mxu0 0
        %954 = vmatpush1.bf16.msra.mxu0 0
        %955 = vmatprep.subr.bf16.mxu0 0
        %956 = vmatpush1.bf16.msra.mxu0 0
        %957 = vmatprep.subr.bf16.mxu0 0
        %958 = vmatpush1.bf16.msra.mxu0 0
        %959 = vmatprep.subr.bf16.mxu0 0
        %960 = vmatpush1.bf16.msra.mxu0 0
        %961 = vmatprep.subr.bf16.mxu0 0
        %962 = vmatpush1.bf16.msra.mxu0 0
        %963 = vmatprep.subr.bf16.mxu0 0
        %964 = vmatpush1.bf16.msra.mxu0 0
        %965 = vmatprep.subr.bf16.mxu0 0
        %966 = vmatpush1.bf16.msra.mxu0 0
        %967 = vmatprep.subr.bf16.mxu0 0
        %968 = vmatpush1.bf16.msra.mxu0 0
        %969 = vmatprep.subr.bf16.mxu0 0
        %970 = vmatpush1.bf16.msra.mxu0 0
        %971 = vmatprep.subr.bf16.mxu0 0
        %972 = vmatpush1.bf16.msra.mxu0 0
        %973 = vmatprep.subr.bf16.mxu0 0
        %974 = vmatpush1.bf16.msra.mxu0 0
        %975 = vmatprep.mubr.bf16.mxu0 0
        %976 = vmatmul.mubr.bf16.gmra.mrb[0].mxu0 %v938
        %v977 = vpop.f32.mrb[0].mxu0
        %v978 = vadd.f32 0.0, %v977
        %v979 = vpop.f32.mrb[0].mxu0
        %v980 = vpop.f32.mrb[0].mxu0
        %v981 = vpop.f32.mrb[0].mxu0
        %982 = vdwg.mxu0
        %v983 = vadd.f32 %v932, %v978
        %984 = vst.msk [vmem:[%s925] sm:$0xff] %vm715, %v983
        %985 = vst.msk [vmem:[%s900] sm:$0xff] %vm785, %v905
        %986 = vrot.lane.b32.xlu0 %v847, 112
        %v987 = vpop.permute.xlu0 %986
        %988 = vrot.lane.b32.xlu0 %v698, 112
        %v989 = vpop.permute.xlu0 %988
        %v991 = vsel %vm715, %v987, 0
        %v994 = vsel %vm715, %v989, 0
        %996 = vmatprep.subr.bf16.mxu0 0
        %997 = vmatpush1.bf16.xpose.msra.mxu0 %v994
        %998 = vmatprep.subr.bf16.mxu0 0
        %999 = vmatpush1.bf16.xpose.msra.mxu0 0
        %1000 = vmatprep.subr.bf16.mxu0 0
        %1001 = vmatpush1.bf16.xpose.msra.mxu0 0
        %1002 = vmatprep.subr.bf16.mxu0 0
        %1003 = vmatpush1.bf16.xpose.msra.mxu0 0
        %1004 = vmatprep.subr.bf16.mxu0 0
        %1005 = vmatpush1.bf16.xpose.msra.mxu0 0
        %1006 = vmatprep.subr.bf16.mxu0 0
        %1007 = vmatpush1.bf16.xpose.msra.mxu0 0
        %1008 = vmatprep.subr.bf16.mxu0 0
        %1009 = vmatpush1.bf16.xpose.msra.mxu0 0
        %1010 = vmatprep.subr.bf16.mxu0 0
        %1011 = vmatpush1.bf16.xpose.msra.mxu0 0
        %1012 = vmatprep.subr.bf16.mxu0 0
        %1013 = vmatpush1.bf16.xpose.msra.mxu0 0
        %1014 = vmatprep.subr.bf16.mxu0 0
        %1015 = vmatpush1.bf16.xpose.msra.mxu0 0
        %1016 = vmatprep.subr.bf16.mxu0 0
        %1017 = vmatpush1.bf16.xpose.msra.mxu0 0
        %1018 = vmatprep.subr.bf16.mxu0 0
        %1019 = vmatpush1.bf16.xpose.msra.mxu0 0
        %1020 = vmatprep.subr.bf16.mxu0 0
        %1021 = vmatpush1.bf16.xpose.msra.mxu0 0
        %1022 = vmatprep.subr.bf16.mxu0 0
        %1023 = vmatpush1.bf16.xpose.msra.mxu0 0
        %1024 = vmatprep.subr.bf16.mxu0 0
        %1025 = vmatpush1.bf16.xpose.msra.mxu0 0
        %1026 = vmatprep.subr.bf16.mxu0 0
        %1027 = vmatpush1.bf16.xpose.msra.mxu0 0
        %1028 = vmatprep.mubr.bf16.mxu0 0
        %1029 = vmatmul.mubr.bf16.gmra.mrb[0].mxu0 %v991
        %v1030 = vpop.f32.mrb[0].mxu0
        %v1031 = vadd.f32 0.0, %v1030
        %v1032 = vpop.f32.mrb[0].mxu0
        %v1033 = vpop.f32.mrb[0].mxu0
        %v1034 = vpop.f32.mrb[0].mxu0
        %1035 = vdwg.mxu0
        %v1036 = vsel %vm714, %v1031, -inf
        %s1037 = scalar_lea.vmem [#allocation3], 16
        %v1038 = vld [vmem:[%s1037] sm:$0xff]
        %v1039 = vsel %vm715, %v1036, -inf
        %1040 = vmax.xlane.f32.xlu0 %v1039
        %v1041 = vpop.xlane.xlu0 %1040
        %v1042 = vmax.f32 %v1038, %v1041
        %v1043 = vsub.f32 %v1038, %v1042
        %v1044 = vmul.f32 %v1043, 1.442695
        %v1045 = vpow.pop %v1044
        %1047 = vset.pattern.permute.xlu0 0
        %1048 = vperm.xlu0 %1047, %v1042
        %v1049 = vpop.permute.xlu0 %1048
        %v1051 = vsub.f32 %v1036, %v1049
        %v1052 = vmul.f32 %v1051, 1.442695
        %v1053 = vpow.pop %v1052
        %s1054 = scalar_lea.vmem [#allocation4], 16
        %v1055 = vld [vmem:[%s1054] sm:$0xff]
        %v1056 = vmul.f32 %v1045, %v1055
        %v1057 = vsel %vm715, %v1053, 0.0
        %1058 = vadd.xlane.f32.xlu0 %v1057
        %v1059 = vpop.xlane.xlu0 %1058
        %v1060 = vadd.f32 %v1056, %v1059
        %1061 = vst.msk [vmem:[%s1054] sm:$0xff] %vm785, %v1060
        %s1062 = scalar_lea.vmem [#allocation5], 16
        %v1063 = vld [vmem:[%s1062] sm:$0xff]
        %1065 = vset.pattern.permute.xlu0 0
        %1066 = vperm.xlu0 %1065, %v1045
        %v1067 = vpop.permute.xlu0 %1066
        %v1069 = vmul.f32 %v1067, %v1063
        %v1070 = vpack.c.bf16 %v1053, %v1053
        %1071 = vrot.lane.b32.xlu0 %v707, 112
        %v1072 = vpop.permute.xlu0 %1071
        %v1074 = vsel %vm715, %v1070, 0
        %v1077 = vsel %vm798, %v1072, 0
        %1079 = vmatprep.subr.bf16.mxu0 0
        %1080 = vmatpush1.bf16.msra.mxu0 %v1077
        %1081 = vmatprep.subr.bf16.mxu0 0
        %1082 = vmatpush1.bf16.msra.mxu0 0
        %1083 = vmatprep.subr.bf16.mxu0 0
        %1084 = vmatpush1.bf16.msra.mxu0 0
        %1085 = vmatprep.subr.bf16.mxu0 0
        %1086 = vmatpush1.bf16.msra.mxu0 0
        %1087 = vmatprep.subr.bf16.mxu0 0
        %1088 = vmatpush1.bf16.msra.mxu0 0
        %1089 = vmatprep.subr.bf16.mxu0 0
        %1090 = vmatpush1.bf16.msra.mxu0 0
        %1091 = vmatprep.subr.bf16.mxu0 0
        %1092 = vmatpush1.bf16.msra.mxu0 0
        %1093 = vmatprep.subr.bf16.mxu0 0
        %1094 = vmatpush1.bf16.msra.mxu0 0
        %1095 = vmatprep.subr.bf16.mxu0 0
        %1096 = vmatpush1.bf16.msra.mxu0 0
        %1097 = vmatprep.subr.bf16.mxu0 0
        %1098 = vmatpush1.bf16.msra.mxu0 0
        %1099 = vmatprep.subr.bf16.mxu0 0
        %1100 = vmatpush1.bf16.msra.mxu0 0
        %1101 = vmatprep.subr.bf16.mxu0 0
        %1102 = vmatpush1.bf16.msra.mxu0 0
        %1103 = vmatprep.subr.bf16.mxu0 0
        %1104 = vmatpush1.bf16.msra.mxu0 0
        %1105 = vmatprep.subr.bf16.mxu0 0
        %1106 = vmatpush1.bf16.msra.mxu0 0
        %1107 = vmatprep.subr.bf16.mxu0 0
        %1108 = vmatpush1.bf16.msra.mxu0 0
        %1109 = vmatprep.subr.bf16.mxu0 0
        %1110 = vmatpush1.bf16.msra.mxu0 0
        %1111 = vmatprep.mubr.bf16.mxu0 0
        %1112 = vmatmul.mubr.bf16.gmra.mrb[0].mxu0 %v1074
        %v1113 = vpop.f32.mrb[0].mxu0
        %v1114 = vadd.f32 0.0, %v1113
        %v1115 = vpop.f32.mrb[0].mxu0
        %v1116 = vpop.f32.mrb[0].mxu0
        %v1117 = vpop.f32.mrb[0].mxu0
        %1118 = vdwg.mxu0
        %v1119 = vadd.f32 %v1069, %v1114
        %1120 = vst.msk [vmem:[%s1062] sm:$0xff] %vm715, %v1119
        %1121 = vst.msk [vmem:[%s1037] sm:$0xff] %vm785, %v1042
        %1122 = vrot.lane.b32.xlu0 %v847, 104
        %v1123 = vpop.permute.xlu0 %1122
        %1124 = vrot.lane.b32.xlu0 %v698, 104
        %v1125 = vpop.permute.xlu0 %1124
        %v1127 = vsel %vm715, %v1123, 0
        %v1130 = vsel %vm715, %v1125, 0
        %1132 = vmatprep.subr.bf16.mxu0 0
        %1133 = vmatpush1.bf16.xpose.msra.mxu0 %v1130
        %1134 = vmatprep.subr.bf16.mxu0 0
        %1135 = vmatpush1.bf16.xpose.msra.mxu0 0
        %1136 = vmatprep.subr.bf16.mxu0 0
        %1137 = vmatpush1.bf16.xpose.msra.mxu0 0
        %1138 = vmatprep.subr.bf16.mxu0 0
        %1139 = vmatpush1.bf16.xpose.msra.mxu0 0
        %1140 = vmatprep.subr.bf16.mxu0 0
        %1141 = vmatpush1.bf16.xpose.msra.mxu0 0
        %1142 = vmatprep.subr.bf16.mxu0 0
        %1143 = vmatpush1.bf16.xpose.msra.mxu0 0
        %1144 = vmatprep.subr.bf16.mxu0 0
        %1145 = vmatpush1.bf16.xpose.msra.mxu0 0
        %1146 = vmatprep.subr.bf16.mxu0 0
        %1147 = vmatpush1.bf16.xpose.msra.mxu0 0
        %1148 = vmatprep.subr.bf16.mxu0 0
        %1149 = vmatpush1.bf16.xpose.msra.mxu0 0
        %1150 = vmatprep.subr.bf16.mxu0 0
        %1151 = vmatpush1.bf16.xpose.msra.mxu0 0
        %1152 = vmatprep.subr.bf16.mxu0 0
        %1153 = vmatpush1.bf16.xpose.msra.mxu0 0
        %1154 = vmatprep.subr.bf16.mxu0 0
        %1155 = vmatpush1.bf16.xpose.msra.mxu0 0
        %1156 = vmatprep.subr.bf16.mxu0 0
        %1157 = vmatpush1.bf16.xpose.msra.mxu0 0
        %1158 = vmatprep.subr.bf16.mxu0 0
        %1159 = vmatpush1.bf16.xpose.msra.mxu0 0
        %1160 = vmatprep.subr.bf16.mxu0 0
        %1161 = vmatpush1.bf16.xpose.msra.mxu0 0
        %1162 = vmatprep.subr.bf16.mxu0 0
        %1163 = vmatpush1.bf16.xpose.msra.mxu0 0
        %1164 = vmatprep.mubr.bf16.mxu0 0
        %1165 = vmatmul.mubr.bf16.gmra.mrb[0].mxu0 %v1127
        %v1166 = vpop.f32.mrb[0].mxu0
        %v1167 = vadd.f32 0.0, %v1166
        %v1168 = vpop.f32.mrb[0].mxu0
        %v1169 = vpop.f32.mrb[0].mxu0
        %v1170 = vpop.f32.mrb[0].mxu0
        %1171 = vdwg.mxu0
        %v1172 = vsel %vm714, %v1167, -inf
        %s1173 = scalar_lea.vmem [#allocation3], 24
        %v1174 = vld [vmem:[%s1173] sm:$0xff]
        %v1175 = vsel %vm715, %v1172, -inf
        %1176 = vmax.xlane.f32.xlu0 %v1175
        %v1177 = vpop.xlane.xlu0 %1176
        %v1178 = vmax.f32 %v1174, %v1177
        %v1179 = vsub.f32 %v1174, %v1178
        %v1180 = vmul.f32 %v1179, 1.442695
        %v1181 = vpow.pop %v1180
        %1183 = vset.pattern.permute.xlu0 0
        %1184 = vperm.xlu0 %1183, %v1178
        %v1185 = vpop.permute.xlu0 %1184
        %v1187 = vsub.f32 %v1172, %v1185
        %v1188 = vmul.f32 %v1187, 1.442695
        %v1189 = vpow.pop %v1188
        %s1190 = scalar_lea.vmem [#allocation4], 24
        %v1191 = vld [vmem:[%s1190] sm:$0xff]
        %v1192 = vmul.f32 %v1181, %v1191
        %v1193 = vsel %vm715, %v1189, 0.0
        %1194 = vadd.xlane.f32.xlu0 %v1193
        %v1195 = vpop.xlane.xlu0 %1194
        %v1196 = vadd.f32 %v1192, %v1195
        %1197 = vst.msk [vmem:[%s1190] sm:$0xff] %vm785, %v1196
        %s1198 = scalar_lea.vmem [#allocation5], 24
        %v1199 = vld [vmem:[%s1198] sm:$0xff]
        %1201 = vset.pattern.permute.xlu0 0
        %1202 = vperm.xlu0 %1201, %v1181
        %v1203 = vpop.permute.xlu0 %1202
        %v1205 = vmul.f32 %v1203, %v1199
        %v1206 = vpack.c.bf16 %v1189, %v1189
        %1207 = vrot.lane.b32.xlu0 %v707, 104
        %v1208 = vpop.permute.xlu0 %1207
        %v1210 = vsel %vm715, %v1206, 0
        %v1213 = vsel %vm798, %v1208, 0
        %1215 = vmatprep.subr.bf16.mxu0 0
        %1216 = vmatpush1.bf16.msra.mxu0 %v1213
        %1217 = vmatprep.subr.bf16.mxu0 0
        %1218 = vmatpush1.bf16.msra.mxu0 0
        %1219 = vmatprep.subr.bf16.mxu0 0
        %1220 = vmatpush1.bf16.msra.mxu0 0
        %1221 = vmatprep.subr.bf16.mxu0 0
        %1222 = vmatpush1.bf16.msra.mxu0 0
        %1223 = vmatprep.subr.bf16.mxu0 0
        %1224 = vmatpush1.bf16.msra.mxu0 0
        %1225 = vmatprep.subr.bf16.mxu0 0
        %1226 = vmatpush1.bf16.msra.mxu0 0
        %1227 = vmatprep.subr.bf16.mxu0 0
        %1228 = vmatpush1.bf16.msra.mxu0 0
        %1229 = vmatprep.subr.bf16.mxu0 0
        %1230 = vmatpush1.bf16.msra.mxu0 0
        %1231 = vmatprep.subr.bf16.mxu0 0
        %1232 = vmatpush1.bf16.msra.mxu0 0
        %1233 = vmatprep.subr.bf16.mxu0 0
        %1234 = vmatpush1.bf16.msra.mxu0 0
        %1235 = vmatprep.subr.bf16.mxu0 0
        %1236 = vmatpush1.bf16.msra.mxu0 0
        %1237 = vmatprep.subr.bf16.mxu0 0
        %1238 = vmatpush1.bf16.msra.mxu0 0
        %1239 = vmatprep.subr.bf16.mxu0 0
        %1240 = vmatpush1.bf16.msra.mxu0 0
        %1241 = vmatprep.subr.bf16.mxu0 0
        %1242 = vmatpush1.bf16.msra.mxu0 0
        %1243 = vmatprep.subr.bf16.mxu0 0
        %1244 = vmatpush1.bf16.msra.mxu0 0
        %1245 = vmatprep.subr.bf16.mxu0 0
        %1246 = vmatpush1.bf16.msra.mxu0 0
        %1247 = vmatprep.mubr.bf16.mxu0 0
        %1248 = vmatmul.mubr.bf16.gmra.mrb[0].mxu0 %v1210
        %v1249 = vpop.f32.mrb[0].mxu0
        %v1250 = vadd.f32 0.0, %v1249
        %v1251 = vpop.f32.mrb[0].mxu0
        %v1252 = vpop.f32.mrb[0].mxu0
        %v1253 = vpop.f32.mrb[0].mxu0
        %1254 = vdwg.mxu0
        %v1255 = vadd.f32 %v1205, %v1250
        %1256 = vst.msk [vmem:[%s1198] sm:$0xff] %vm715, %v1255
        %1257 = vst.msk [vmem:[%s1173] sm:$0xff] %vm785, %v1178
        %p1258 = scmp.eq.s32.totalorder %s30, 1
        // Predicated region
        $region61: #{multihead_cross_attention.1} parent=51 // pred_check
          %p1259 = pneg %p1258
        $region62: #{multihead_cross_attention.1} parent=51 // pred_check_branch
          %1261 = sbr.rel (%p1259) target = $region64
        $region63: #{multihead_cross_attention.1} parent=51 // pred_region
          %v1262 = vld [vmem:[#allocation4] sm:$0xff]
          %v1263 = vrcp.pop %v1262
          %v1264 = vld [vmem:[#allocation5] sm:$0xff]
          %1266 = vset.pattern.permute.xlu0 0
          %1267 = vperm.xlu0 %1266, %v1263
          %v1268 = vpop.permute.xlu0 %1267
          %v1270 = vmul.f32 %v1264, %v1268
          %v1271 = vpack.c.bf16 %v1270, %v1270
          %v1272 = vld [vmem:[%s917] sm:$0xff]
          %v1273 = vrcp.pop %v1272
          %v1274 = vld [vmem:[%s925] sm:$0xff]
          %1276 = vset.pattern.permute.xlu0 0
          %1277 = vperm.xlu0 %1276, %v1273
          %v1278 = vpop.permute.xlu0 %1277
          %v1280 = vmul.f32 %v1274, %v1278
          %v1281 = vpack.c.bf16 %v1280, %v1280
          %v1282 = vld [vmem:[%s1054] sm:$0xff]
          %v1283 = vrcp.pop %v1282
          %v1284 = vld [vmem:[%s1062] sm:$0xff]
          %1286 = vset.pattern.permute.xlu0 0
          %1287 = vperm.xlu0 %1286, %v1283
          %v1288 = vpop.permute.xlu0 %1287
          %v1290 = vmul.f32 %v1284, %v1288
          %v1291 = vpack.c.bf16 %v1290, %v1290
          %v1292 = vld [vmem:[%s1190] sm:$0xff]
          %v1293 = vrcp.pop %v1292
          %v1294 = vld [vmem:[%s1198] sm:$0xff]
          %1296 = vset.pattern.permute.xlu0 0
          %1297 = vperm.xlu0 %1296, %v1293
          %v1298 = vpop.permute.xlu0 %1297
          %v1300 = vmul.f32 %v1294, %v1298
          %v1301 = vpack.c.bf16 %v1300, %v1300
          %1303 = vrot.lane.b32.xlu0 %v1281, 8
          %v1304 = vpop.permute.xlu0 %1303
          %1306 = vrot.lane.b32.xlu0 %v1291, 16
          %v1307 = vpop.permute.xlu0 %1306
          %1309 = vrot.lane.b32.xlu0 %v1301, 24
          %v1310 = vpop.permute.xlu0 %1309
          %v1313 = vsel %vm715, %v1271, %v1304
          %vm1314 = vcmask 130048
          %v1316 = vsel %vm1314, %v1313, %v1307
          %vm1317 = vcmask 195584
          %v1319 = vsel %vm1317, %v1316, %v1310
          %v1320 = vld [vmem:[%s365] sm:$0xff]
          %v1321 = vld [vmem:[%s4] sm:$0xf]
          %v1322 = vld [vmem:[%s4 + $0x4] sm:$0xf]
          %v1323 = vld [vmem:[%s4 + $0x8] sm:$0xf]
          %v1324 = vld [vmem:[%s4 + $0xc] sm:$0xf]
          %v1329 = vunpack.c.l.b16 %v1321
          %v1330 = vunpack.c.l.b16 %v1322
          %v1331 = vunpack.c.l.b16 %v1323
          %v1332 = vunpack.c.l.b16 %v1324
          %v1333 = vpack.c.b16 %v1330, %v1329
          %v1334 = vpack.c.b16 %v1332, %v1331
          %vm1337 = vcmask 261120
          %v1338 = vsel %vm1337, %v1319, 0
          %1340 = vmatprep.subr.bf16.mxu0 0
          %1341 = vmatpush1.bf16.msra.mxu0 %v1333
          %1342 = vmatprep.subr.bf16.mxu0 0
          %1343 = vmatpush1.bf16.msra.mxu0 %v1334
          %1344 = vmatprep.subr.bf16.mxu0 0
          %1345 = vmatpush1.bf16.msra.mxu0 0
          %1346 = vmatprep.subr.bf16.mxu0 0
          %1347 = vmatpush1.bf16.msra.mxu0 0
          %1348 = vmatprep.subr.bf16.mxu0 0
          %1349 = vmatpush1.bf16.msra.mxu0 0
          %1350 = vmatprep.subr.bf16.mxu0 0
          %1351 = vmatpush1.bf16.msra.mxu0 0
          %1352 = vmatprep.subr.bf16.mxu0 0
          %1353 = vmatpush1.bf16.msra.mxu0 0
          %1354 = vmatprep.subr.bf16.mxu0 0
          %1355 = vmatpush1.bf16.msra.mxu0 0
          %1356 = vmatprep.subr.bf16.mxu0 0
          %1357 = vmatpush1.bf16.msra.mxu0 0
          %1358 = vmatprep.subr.bf16.mxu0 0
          %1359 = vmatpush1.bf16.msra.mxu0 0
          %1360 = vmatprep.subr.bf16.mxu0 0
          %1361 = vmatpush1.bf16.msra.mxu0 0
          %1362 = vmatprep.subr.bf16.mxu0 0
          %1363 = vmatpush1.bf16.msra.mxu0 0
          %1364 = vmatprep.subr.bf16.mxu0 0
          %1365 = vmatpush1.bf16.msra.mxu0 0
          %1366 = vmatprep.subr.bf16.mxu0 0
          %1367 = vmatpush1.bf16.msra.mxu0 0
          %1368 = vmatprep.subr.bf16.mxu0 0
          %1369 = vmatpush1.bf16.msra.mxu0 0
          %1370 = vmatprep.subr.bf16.mxu0 0
          %1371 = vmatpush1.bf16.msra.mxu0 0
          %1372 = vmatprep.mubr.bf16.mxu0 0
          %1373 = vmatmul.mubr.bf16.gmra.mrb[0].mxu0 %v1338
          %v1374 = vpop.f32.mrb[0].mxu0
          %v1375 = vadd.f32 0.0, %v1374
          %v1376 = vpop.f32.mrb[0].mxu0
          %v1377 = vpop.f32.mrb[0].mxu0
          %v1378 = vpop.f32.mrb[0].mxu0
          %1379 = vdwg.mxu0
          %v1380 = vadd.f32 %v1320, %v1375
          %1381 = vst [vmem:[%s365] sm:$0xff] %v1380
        $region64: #{multihead_cross_attention.1} parent=51 // pred_fallthru
          _
        %s1382 = sand.u32 %s234, 1
        %s1383 = scalar_lea.sflag [#allocation8], %s1382
        %s1384 = sand.u32 %s234, 1
        %s1385 = smul.addr %s1384, 8
        %s1386 = scalar_lea.vmem [#allocation9], %s1385
        // Predicated region
        $region65: #{multihead_cross_attention.1} parent=51 // pred_check
          %p1387 = pneg %p244
        $region66: #{multihead_cross_attention.1} parent=51 // pred_check_branch
          %1389 = sbr.rel (%p1387) target = $region68
        $region67: #{multihead_cross_attention.1} parent=51 // pred_region
          %s1391 = ssub.s32 128, 128
          %1392 = vsyncadd %s1383, %s1391
          %s1393 = smul.addr %s28, 2
          %s1394 = sadd.s32 %s29, %s1393
          %s1395 = smul.addr %s1394, 128
          %s1396 = scalar_lea.hbm %s8, %s1395
          %s1398 = sshll.u32 %s1386, 4
          %s1399 = int_to_ptr.vmem [resolvable:$true] %s1398
          %1401 = dma.vmem_to_hbm [thread:$0]  %s1399, 128, %s1396, %s1383
        $region68: #{multihead_cross_attention.1} parent=51 // pred_fallthru
          _
      $region52: #{multihead_cross_attention.1} parent=5 // pred_fallthru
        _
      %p1402 = scmp.le.s32.totalorder 2, %s18
      // Predicated region
      $region69: #{multihead_cross_attention.1} parent=5 // pred_check
        %p1403 = pneg %p1402
      $region70: #{multihead_cross_attention.1} parent=5 // pred_check_branch
        %1405 = sbr.rel (%p1403) target = $region72
      $region71: #{multihead_cross_attention.1} parent=5 // pred_region
        %s1406 = ssub.s32 %s18, 2
        // Predicated region
        $region73: #{multihead_cross_attention.1} parent=71 // pred_check
          %p1407 = pneg %p250
        $region74: #{multihead_cross_attention.1} parent=71 // pred_check_branch
          %1409 = sbr.rel (%p1407) target = $region76
        $region75: #{multihead_cross_attention.1} parent=71 // pred_region
          %s1410 = sand.u32 %s235, 1
          %s1411 = scalar_lea.sflag [#allocation8], %s1410
          %s1412 = sand.u32 %s235, 1
          %s1413 = smul.addr %s1412, 8
          %s1414 = scalar_lea.vmem [#allocation9], %s1413
          %1415 = dma.done %s1411, 128
        $region76: #{multihead_cross_attention.1} parent=71 // pred_fallthru
          _
      $region72: #{multihead_cross_attention.1} parent=5 // pred_fallthru
        _
    $region6: #{multihead_cross_attention.1} parent=1 // loop_footer
      %s22 = sadd.s32 1, %s18
    $region7: #{multihead_cross_attention.1} parent=1 // loop_footer_branch
      %17 = sbr.rel target = $region3
    $region8: #{multihead_cross_attention.1} parent=1 // loop_exit
      _
    %1416 = vsyncpa [#allocation7], 1
    %s1417 = scalar_lea.sflag [#allocation7], 1
    %1418 = vsyncpa %s1417, 1
    %1419 = vsyncpa [#allocation8], 1
    %s1420 = scalar_lea.sflag [#allocation8], 1
    %1421 = vsyncpa %s1420, 1

</llo_original>
